<compile_context>
chip_gen: v6e
topology: v6e:2x2x1
jax: 0.10.0
libtpu: 0.0.40
codegen_flags: <defaults>
</compile_context>

<pallas_src>
import functools

import jax
import jax.numpy as jnp
from jax.experimental import pallas as pl
from jax.experimental.pallas import tpu as pltpu

IN_FEATURES = 300
HIDDEN = 512
OUT_FEATURES = 2
N_PAD = 128          # 2 padded to 128 -> unmasked lane-dense output stores


def _round_up(x, m):
    return (x + m - 1) // m * m


def mlp_kernel(x_ref, w1_ref, b1_ref, w2_ref, b2_ref, w3_ref, b3_ref, o_ref):
    # In-kernel cast of the streamed f32 tile to the MXU dtype (bf16).
    x = x_ref[...].astype(w1_ref.dtype)
    # Layer 1: (TB, 300) @ (300, 512); bias + ReLU in f32 (v5e VPU has no bf16),
    # then drop to bf16 so the (TB, 512) temporary never spills as f32.
    h1 = jnp.dot(x, w1_ref[...], preferred_element_type=jnp.float32)
    h1 = jnp.maximum(h1 + b1_ref[...], 0.0).astype(w2_ref.dtype)
    # Layer 2: (TB, 512) @ (512, 512)
    h2 = jnp.dot(h1, w2_ref[...], preferred_element_type=jnp.float32)
    h2 = jnp.maximum(h2 + b2_ref[...], 0.0).astype(w3_ref.dtype)
    # Layer 3: (TB, 512) @ (512, 128)  (N zero-padded; real logits in lanes 0..1)
    logits = jnp.dot(h2, w3_ref[...], preferred_element_type=jnp.float32)
    o_ref[...] = (logits + b3_ref[...]).astype(o_ref.dtype)


@functools.partial(jax.jit, static_argnames=("block_b",))
def neural_network_forward(x, kernel_params, *, block_b=1024):
    """x: (B, ...) flattened to (B, 300). Returns (B, 2) f32 logits."""
    w1, b1, w2, b2, w3, b3 = kernel_params
    b = x.shape[0]
    x2d = x.reshape(b, -1)
    assert x2d.shape[1] == IN_FEATURES, (
        f"expected {IN_FEATURES} features, got {x2d.shape[1]}")

    # Batch tile: big enough to amortize grid-step overhead, capped so the
    # grid keeps >= ~4 steps (both v7x TensorCores busy), and kept small for
    # tiny batches.  Multiple of 16 so bf16 output sublane packing is aligned.
    tb = min(block_b,
             _round_up(pl.cdiv(b, 4), 128),
             _round_up(b, 16))
    grid = (pl.cdiv(b, tb),)   # partial last block: OOB rows masked on write

    cost = pl.CostEstimate(
        flops=2 * b * (IN_FEATURES * HIDDEN + HIDDEN * HIDDEN + HIDDEN * N_PAD),
        transcendentals=0,
        bytes_accessed=(
            int(x2d.size) * x2d.dtype.itemsize
            + sum(int(p.size) * p.dtype.itemsize for p in kernel_params)
            + b * N_PAD * 2
        ),
    )

    out = pl.pallas_call(
        mlp_kernel,
        out_shape=jax.ShapeDtypeStruct((b, N_PAD), jnp.bfloat16),
        grid=grid,
        in_specs=[
            pl.BlockSpec((tb, IN_FEATURES), lambda i: (i, 0)),     # x tiles: streamed
            pl.BlockSpec((IN_FEATURES, HIDDEN), lambda i: (0, 0)), # weights: resident
            pl.BlockSpec((1, HIDDEN), lambda i: (0, 0)),
            pl.BlockSpec((HIDDEN, HIDDEN), lambda i: (0, 0)),
            pl.BlockSpec((1, HIDDEN), lambda i: (0, 0)),
            pl.BlockSpec((HIDDEN, N_PAD), lambda i: (0, 0)),
            pl.BlockSpec((1, N_PAD), lambda i: (0, 0)),
        ],
        out_specs=pl.BlockSpec((tb, N_PAD), lambda i: (i, 0)),
        compiler_params=pltpu.CompilerParams(
            dimension_semantics=("parallel",),                     # megacore on v7x
        ),
        cost_estimate=cost,
    )(x2d, w1, b1, w2, b2, w3, b3)

    return out[:, :OUT_FEATURES].astype(jnp.float32)


def init_params(key):
    """f32 params at PyTorch-equivalent logical shapes (W stored as (in, out))."""
    k1, k2, k3, k4, k5, k6 = jax.random.split(key, 6)

    def uniform(k, shape, fan_in):
        bound = 1.0 / jnp.sqrt(fan_in)
        return jax.random.uniform(k, shape, jnp.float32, -bound, bound)

    w1 = uniform(k1, (IN_FEATURES, HIDDEN), float(IN_FEATURES))
    b1 = uniform(k2, (HIDDEN,), float(IN_FEATURES))
    w2 = uniform(k3, (HIDDEN, HIDDEN), float(HIDDEN))
    b2 = uniform(k4, (HIDDEN,), float(HIDDEN))
    w3 = uniform(k5, (HIDDEN, OUT_FEATURES), float(HIDDEN))
    b3 = uniform(k6, (OUT_FEATURES,), float(HIDDEN))
    return (w1, b1, w2, b2, w3, b3)


def prepare_params(params, dtype=jnp.bfloat16):
    """Cast weights to the MXU compute dtype and pad the output dim to 128.

    Padded cols of w3/b3 are exactly zero, so the math is unchanged; biases
    stay f32 for the elementwise (VPU) path.  w1 is NOT K-padded: the kernel
    contracts over K=300 directly.
    """
    w1, b1, w2, b2, w3, b3 = params
    w1p = w1.astype(dtype)
    w2p = w2.astype(dtype)
    w3p = jnp.pad(w3, ((0, 0), (0, N_PAD - OUT_FEATURES))).astype(dtype)
    b1p = b1.reshape(1, HIDDEN).astype(jnp.float32)
    b2p = b2.reshape(1, HIDDEN).astype(jnp.float32)
    b3p = jnp.pad(b3.reshape(1, OUT_FEATURES),
                  ((0, 0), (0, N_PAD - OUT_FEATURES))).astype(jnp.float32)
    return (w1p, b1p, w2p, b2p, w3p, b3p)


def reference_forward(x, params):
    """Pure-JAX f32 reference matching PyTorch semantics."""
    w1, b1, w2, b2, w3, b3 = params
    x2d = x.reshape(x.shape[0], -1)
    h1 = jnp.maximum(x2d @ w1 + b1, 0.0)
    h2 = jnp.maximum(h1 @ w2 + b2, 0.0)
    return h2 @ w3 + b3


if __name__ == "__main__":
    key = jax.random.PRNGKey(0)
    kx, kp = jax.random.split(key)

    # Small input consistent with the module: Flatten() of (B, 3, 10, 10) -> 300 features.
    batch = 4
    x = jax.random.normal(kx, (batch, 3, 10, 10), jnp.float32)
    params = init_params(kp)
    kernel_params = prepare_params(params, dtype=jnp.bfloat16)

    logits = neural_network_forward(x, kernel_params)
    jax.block_until_ready(logits)

    ref = reference_forward(x, params)
    assert logits.shape == (batch, OUT_FEATURES)
    # bf16 weights/activations/output with f32 accumulation -> ~1e-2 level error vs f32 ref.
    assert jnp.allclose(logits, ref, atol=5e-2, rtol=5e-2), "mismatch vs reference"

    print("KERNEL_OK")
</pallas_src>

<mosaic_0001>
module attributes {stable_mosaic.version = 11 : i64} {
  func.func @mlp_kernel(%arg0: i32, %arg1: memref<16x300xf32, #tpu.memory_space<vmem>>, %arg2: memref<300x512xbf16, #tpu.memory_space<vmem>>, %arg3: memref<1x512xf32, #tpu.memory_space<vmem>>, %arg4: memref<512x512xbf16, #tpu.memory_space<vmem>>, %arg5: memref<1x512xf32, #tpu.memory_space<vmem>>, %arg6: memref<512x128xbf16, #tpu.memory_space<vmem>>, %arg7: memref<1x128xf32, #tpu.memory_space<vmem>>, %arg8: memref<16x128xbf16, #tpu.memory_space<vmem>>) attributes {dimension_semantics = [#tpu.dimension_semantics<parallel>], iteration_bounds = array<i64: 1>, scalar_prefetch = 0 : i64, scratch_operands = 0 : i64, tpu.core_type = #tpu.core_type<tc>, window_params = [{transform_indices = @transform_0, window_bounds = array<i64: 16, 300>}, {pipeline_mode = #tpu.pipeline_mode<synchronous>, transform_indices = @transform_1, window_bounds = array<i64: 300, 512>}, {pipeline_mode = #tpu.pipeline_mode<synchronous>, transform_indices = @transform_2, window_bounds = array<i64: 1, 512>}, {pipeline_mode = #tpu.pipeline_mode<synchronous>, transform_indices = @transform_3, window_bounds = array<i64: 512, 512>}, {pipeline_mode = #tpu.pipeline_mode<synchronous>, transform_indices = @transform_4, window_bounds = array<i64: 1, 512>}, {pipeline_mode = #tpu.pipeline_mode<synchronous>, transform_indices = @transform_5, window_bounds = array<i64: 512, 128>}, {pipeline_mode = #tpu.pipeline_mode<synchronous>, transform_indices = @transform_6, window_bounds = array<i64: 1, 128>}, {transform_indices = @transform_7, window_bounds = array<i64: 16, 128>}]} {
    %c0 = arith.constant 0 : index
    %c0_0 = arith.constant 0 : index
    %0 = vector.load %arg1[%c0, %c0_0] : memref<16x300xf32, #tpu.memory_space<vmem>>, vector<16x300xf32>
    %1 = arith.truncf %0 : vector<16x300xf32> to vector<16x300xbf16>
    %c0_1 = arith.constant 0 : index
    %c0_2 = arith.constant 0 : index
    %2 = vector.load %arg2[%c0_1, %c0_2] : memref<300x512xbf16, #tpu.memory_space<vmem>>, vector<300x512xbf16>
    %cst = arith.constant dense<0.000000e+00> : vector<16x512xf32>
    %3 = tpu.matmul %1, %2, %cst {dimension_numbers = #tpu.dot_dimension_numbers<[1], [0], [0], [1], [0, 0, 1, 1], [], []>} : vector<16x300xbf16>, vector<300x512xbf16>, vector<16x512xf32> -> vector<16x512xf32>
    %c0_3 = arith.constant 0 : index
    %c0_4 = arith.constant 0 : index
    %4 = vector.load %arg3[%c0_3, %c0_4] : memref<1x512xf32, #tpu.memory_space<vmem>>, vector<1x512xf32>
    %5 = vector.broadcast %4 : vector<1x512xf32> to vector<16x512xf32>
    %6 = arith.addf %3, %5 : vector<16x512xf32>
    %cst_5 = arith.constant 0.000000e+00 : f32
    %7 = vector.broadcast %cst_5 : f32 to vector<16x512xf32>
    %8 = arith.maximumf %6, %7 : vector<16x512xf32>
    %9 = arith.truncf %8 : vector<16x512xf32> to vector<16x512xbf16>
    %c0_6 = arith.constant 0 : index
    %c0_7 = arith.constant 0 : index
    %10 = vector.load %arg4[%c0_6, %c0_7] : memref<512x512xbf16, #tpu.memory_space<vmem>>, vector<512x512xbf16>
    %cst_8 = arith.constant dense<0.000000e+00> : vector<16x512xf32>
    %11 = tpu.matmul %9, %10, %cst_8 {dimension_numbers = #tpu.dot_dimension_numbers<[1], [0], [0], [1], [0, 0, 1, 1], [], []>} : vector<16x512xbf16>, vector<512x512xbf16>, vector<16x512xf32> -> vector<16x512xf32>
    %c0_9 = arith.constant 0 : index
    %c0_10 = arith.constant 0 : index
    %12 = vector.load %arg5[%c0_9, %c0_10] : memref<1x512xf32, #tpu.memory_space<vmem>>, vector<1x512xf32>
    %13 = vector.broadcast %12 : vector<1x512xf32> to vector<16x512xf32>
    %14 = arith.addf %11, %13 : vector<16x512xf32>
    %cst_11 = arith.constant 0.000000e+00 : f32
    %15 = vector.broadcast %cst_11 : f32 to vector<16x512xf32>
    %16 = arith.maximumf %14, %15 : vector<16x512xf32>
    %17 = arith.truncf %16 : vector<16x512xf32> to vector<16x512xbf16>
    %c0_12 = arith.constant 0 : index
    %c0_13 = arith.constant 0 : index
    %18 = vector.load %arg6[%c0_12, %c0_13] : memref<512x128xbf16, #tpu.memory_space<vmem>>, vector<512x128xbf16>
    %cst_14 = arith.constant dense<0.000000e+00> : vector<16x128xf32>
    %19 = tpu.matmul %17, %18, %cst_14 {dimension_numbers = #tpu.dot_dimension_numbers<[1], [0], [0], [1], [0, 0, 1, 1], [], []>} : vector<16x512xbf16>, vector<512x128xbf16>, vector<16x128xf32> -> vector<16x128xf32>
    %c0_15 = arith.constant 0 : index
    %c0_16 = arith.constant 0 : index
    %20 = vector.load %arg7[%c0_15, %c0_16] : memref<1x128xf32, #tpu.memory_space<vmem>>, vector<1x128xf32>
    %21 = vector.broadcast %20 : vector<1x128xf32> to vector<16x128xf32>
    %22 = arith.addf %19, %21 : vector<16x128xf32>
    %23 = arith.truncf %22 : vector<16x128xf32> to vector<16x128xbf16>
    %c0_17 = arith.constant 0 : index
    %c0_18 = arith.constant 0 : index
    %24 = vector.load %arg8[%c0_17, %c0_18] : memref<16x128xbf16, #tpu.memory_space<vmem>>, vector<16x128xbf16>
    tpu.vector_store %arg8[%c0_17, %c0_18], %23 {strides = array<i32>} : memref<16x128xbf16, #tpu.memory_space<vmem>>, vector<16x128xbf16>,
    return
  }
  func.func @transform_0(%arg0: i32) -> (i32, i32) {
    %c0_i32 = arith.constant 0 : i32
    %c0_i32_0 = arith.constant 0 : i32
    return %arg0, %c0_i32 : i32, i32
  }
  func.func @transform_1(%arg0: i32) -> (i32, i32) {
    %c0_i32 = arith.constant 0 : i32
    %c0_i32_0 = arith.constant 0 : i32
    %c0_i32_1 = arith.constant 0 : i32
    return %c0_i32, %c0_i32_0 : i32, i32
  }
  func.func @transform_2(%arg0: i32) -> (i32, i32) {
    %c0_i32 = arith.constant 0 : i32
    %c0_i32_0 = arith.constant 0 : i32
    %c0_i32_1 = arith.constant 0 : i32
    return %c0_i32, %c0_i32_0 : i32, i32
  }
  func.func @transform_3(%arg0: i32) -> (i32, i32) {
    %c0_i32 = arith.constant 0 : i32
    %c0_i32_0 = arith.constant 0 : i32
    %c0_i32_1 = arith.constant 0 : i32
    return %c0_i32, %c0_i32_0 : i32, i32
  }
  func.func @transform_4(%arg0: i32) -> (i32, i32) {
    %c0_i32 = arith.constant 0 : i32
    %c0_i32_0 = arith.constant 0 : i32
    %c0_i32_1 = arith.constant 0 : i32
    return %c0_i32, %c0_i32_0 : i32, i32
  }
  func.func @transform_5(%arg0: i32) -> (i32, i32) {
    %c0_i32 = arith.constant 0 : i32
    %c0_i32_0 = arith.constant 0 : i32
    %c0_i32_1 = arith.constant 0 : i32
    return %c0_i32, %c0_i32_0 : i32, i32
  }
  func.func @transform_6(%arg0: i32) -> (i32, i32) {
    %c0_i32 = arith.constant 0 : i32
    %c0_i32_0 = arith.constant 0 : i32
    %c0_i32_1 = arith.constant 0 : i32
    return %c0_i32, %c0_i32_0 : i32, i32
  }
  func.func @transform_7(%arg0: i32) -> (i32, i32) {
    %c0_i32 = arith.constant 0 : i32
    %c0_i32_0 = arith.constant 0 : i32
    return %arg0, %c0_i32 : i32, i32
  }
}

</mosaic_0001>

<llo_original>
// kernel: neural_network_forward.1
$region0: #{neural_network_forward.1}
  #allocation0 [shape = 'u32[]', space=smem, size = 0x4, offset = 0x4, fixed_abs, tag = 'smem constant byte address 0x4 - core index']
  #allocation1 [shape = 'u32[144,128]{1,0:T(1,128)}', space=vmem, size = 0x12000, scoped, tag = 'internal scratch']
  %s0 = inlined_call_operand.vmem [shape: f32[4,300], index: 0, kind: input, shape index: {}]
  %s1 = inlined_call_operand.hbm [shape: bf16[300,512], index: 1, kind: input, shape index: {}]
  %s2 = inlined_call_operand.vmem [shape: f32[1,512], index: 2, kind: input, shape index: {}]
  %s3 = inlined_call_operand.hbm [shape: bf16[512,512], index: 3, kind: input, shape index: {}]
  %s4 = inlined_call_operand.vmem [shape: f32[1,512], index: 4, kind: input, shape index: {}]
  %s5 = inlined_call_operand.vmem [shape: bf16[512,128], index: 5, kind: input, shape index: {}]
  %s6 = inlined_call_operand.vmem [shape: f32[1,128], index: 6, kind: input, shape index: {}]
  %s7 = inlined_call_operand.vmem [shape: bf16[4,128], index: 7, kind: output, shape index: {}]
  %s8 = sld [smem:[#allocation0]]
  $region76: #{neural_network_forward.1} parent=0
    _
  %s10 = ssub.s32 1, %s8
  %s11 = scalar_select 0, %s10, %s8
  $region1: #{neural_network_forward.1} parent=0
    #allocation2 [shape = 'u8[311296]{0}', space=vmem, size = 0x4c000, scoped, tag = 'input window, operand 1, single buffered']
    #allocation3 [shape = 's32[1]{0}', space=sflag, size = 0x4, scoped, tag = 'scoped memory for neural_network_forward.1']
    #allocation4 [shape = 'u8[524288]{0}', space=vmem, size = 0x80000, scoped, tag = 'input window, operand 3, single buffered']
    #allocation5 [shape = 's32[1]{0}', space=sflag, size = 0x4, scoped, tag = 'scoped memory for neural_network_forward.1']
    #allocation6 [shape = 'u8[4096]{0}', space=vmem, size = 0x1000, scoped, tag = 'output window, operand 0, single buffered']
    %12 = vsyncpa [#allocation3], 0
    %13 = vsyncpa [#allocation5], 0
    // Predicated region
    $region2: #{neural_network_forward.1} parent=1 // pred_check
      _
    $region3: #{neural_network_forward.1} parent=1 // pred_check_branch
      %15 = sbr.rel (0) target = $region5
    $region4: #{neural_network_forward.1} parent=1 // pred_region
      _
    $region5: #{neural_network_forward.1} parent=1 // pred_fallthru
      _
    // Predicated region
    $region6: #{neural_network_forward.1} parent=1 // pred_check
      _
    $region7: #{neural_network_forward.1} parent=1 // pred_check_branch
      %17 = sbr.rel (0) target = $region9
    $region8: #{neural_network_forward.1} parent=1 // pred_region
      %s19 = ssub.s32 9728, 9728
      %20 = vsyncadd [#allocation3], %s19
      %s21 = sshll.u32 [#allocation2], 4
      %s22 = int_to_ptr.vmem [resolvable:$true] %s21
      %27 = dma.hbm_to_vmem [thread:$0]  %s1, 9728, %s22, [#allocation3], 256, 256, 16
    $region9: #{neural_network_forward.1} parent=1 // pred_fallthru
      _
    // Predicated region
    $region10: #{neural_network_forward.1} parent=1 // pred_check
      _
    $region11: #{neural_network_forward.1} parent=1 // pred_check_branch
      %29 = sbr.rel (0) target = $region13
    $region12: #{neural_network_forward.1} parent=1 // pred_region
      _
    $region13: #{neural_network_forward.1} parent=1 // pred_fallthru
      _
    // Predicated region
    $region14: #{neural_network_forward.1} parent=1 // pred_check
      _
    $region15: #{neural_network_forward.1} parent=1 // pred_check_branch
      %31 = sbr.rel (0) target = $region17
    $region16: #{neural_network_forward.1} parent=1 // pred_region
      %s33 = ssub.s32 16384, 16384
      %34 = vsyncadd [#allocation5], %s33
      %s35 = sshll.u32 [#allocation4], 4
      %s36 = int_to_ptr.vmem [resolvable:$true] %s35
      %41 = dma.hbm_to_vmem [thread:$0]  %s3, 16384, %s36, [#allocation5], 256, 256, 16
    $region17: #{neural_network_forward.1} parent=1 // pred_fallthru
      _
    // Predicated region
    $region18: #{neural_network_forward.1} parent=1 // pred_check
      _
    $region19: #{neural_network_forward.1} parent=1 // pred_check_branch
      %43 = sbr.rel (0) target = $region21
    $region20: #{neural_network_forward.1} parent=1 // pred_region
      _
    $region21: #{neural_network_forward.1} parent=1 // pred_fallthru
      _
    // Predicated region
    $region22: #{neural_network_forward.1} parent=1 // pred_check
      _
    $region23: #{neural_network_forward.1} parent=1 // pred_check_branch
      %45 = sbr.rel (0) target = $region25
    $region24: #{neural_network_forward.1} parent=1 // pred_region
      _
    $region25: #{neural_network_forward.1} parent=1 // pred_fallthru
      _
    // Predicated region
    $region26: #{neural_network_forward.1} parent=1 // pred_check
      _
    $region27: #{neural_network_forward.1} parent=1 // pred_check_branch
      %47 = sbr.rel (0) target = $region29
    $region28: #{neural_network_forward.1} parent=1 // pred_region
      _
    $region29: #{neural_network_forward.1} parent=1 // pred_fallthru
      _
    // Predicated region
    $region30: #{neural_network_forward.1} parent=1 // pred_check
      _
    $region31: #{neural_network_forward.1} parent=1 // pred_check_branch
      %49 = sbr.rel (0) target = $region33
    $region32: #{neural_network_forward.1} parent=1 // pred_region
      %50 = dma.done [#allocation3], 9728
    $region33: #{neural_network_forward.1} parent=1 // pred_fallthru
      _
    // Predicated region
    $region34: #{neural_network_forward.1} parent=1 // pred_check
      _
    $region35: #{neural_network_forward.1} parent=1 // pred_check_branch
      %52 = sbr.rel (0) target = $region37
    $region36: #{neural_network_forward.1} parent=1 // pred_region
      %53 = dma.done [#allocation5], 16384
    $region37: #{neural_network_forward.1} parent=1 // pred_fallthru
      _
    %v55 = vld [vmem:[%s0] sm:$0xff]
    %v56 = vld [vmem:[%s0 + $0x8] sm:$0xf]
    %v57 = vld [vmem:[%s0 + $0xc] sm:$0xff]
    %v58 = vld [vmem:[%s0 + $0x14] sm:$0xf]
    %v59 = vld [vmem:[%s0 + $0x18] sm:$0xff]
    %v60 = vld [vmem:[%s0 + $0x20] sm:$0xf]
    %v61 = vld [vmem:[%s0 + $0x24] sm:$0xff]
    %v62 = vld [vmem:[%s0 + $0x2c] sm:$0xf]
    %v71 = vcombine.low %v55, %v57
    %v72 = vcombine.high %v55, %v57
    %v73 = vcombine.low %v56, %v58
    %v74 = vcombine.low %v59, %v61
    %v75 = vcombine.high %v59, %v61
    %v76 = vcombine.low %v60, %v62
    %v83 = vpack.c.bf16 %v74, %v71
    %v84 = vpack.c.bf16 %v75, %v72
    %v85 = vpack.c.bf16 %v76, %v73
    %v86 = vld [vmem:[#allocation2] sm:$0xff]
    %v87 = vld [vmem:[#allocation2 + $0x8] sm:$0xff]
    %v88 = vld [vmem:[#allocation2 + $0x10] sm:$0xff]
    %v89 = vld [vmem:[#allocation2 + $0x18] sm:$0xff]
    %v90 = vld [vmem:[#allocation2 + $0x20] sm:$0xff]
    %v91 = vld [vmem:[#allocation2 + $0x28] sm:$0xff]
    %v92 = vld [vmem:[#allocation2 + $0x30] sm:$0xff]
    %v93 = vld [vmem:[#allocation2 + $0x38] sm:$0xff]
    %v94 = vld [vmem:[#allocation2 + $0x40] sm:$0xff]
    %v95 = vld [vmem:[#allocation2 + $0x48] sm:$0xff]
    %v96 = vld [vmem:[#allocation2 + $0x50] sm:$0xff]
    %v97 = vld [vmem:[#allocation2 + $0x58] sm:$0xff]
    %v98 = vld [vmem:[#allocation2 + $0x60] sm:$0xff]
    %v99 = vld [vmem:[#allocation2 + $0x68] sm:$0xff]
    %v100 = vld [vmem:[#allocation2 + $0x70] sm:$0xff]
    %v101 = vld [vmem:[#allocation2 + $0x78] sm:$0xff]
    %v102 = vld [vmem:[#allocation2 + $0x80] sm:$0xff]
    %v103 = vld [vmem:[#allocation2 + $0x88] sm:$0xff]
    %v104 = vld [vmem:[#allocation2 + $0x90] sm:$0xff]
    %v105 = vld [vmem:[#allocation2 + $0x98] sm:$0xff]
    %v106 = vld [vmem:[#allocation2 + $0xa0] sm:$0xff]
    %v107 = vld [vmem:[#allocation2 + $0xa8] sm:$0xff]
    %v108 = vld [vmem:[#allocation2 + $0xb0] sm:$0xff]
    %v109 = vld [vmem:[#allocation2 + $0xb8] sm:$0xff]
    %v110 = vld [vmem:[#allocation2 + $0xc0] sm:$0xff]
    %v111 = vld [vmem:[#allocation2 + $0xc8] sm:$0xff]
    %v112 = vld [vmem:[#allocation2 + $0xd0] sm:$0xff]
    %v113 = vld [vmem:[#allocation2 + $0xd8] sm:$0xff]
    %v114 = vld [vmem:[#allocation2 + $0xe0] sm:$0xff]
    %v115 = vld [vmem:[#allocation2 + $0xe8] sm:$0xff]
    %v116 = vld [vmem:[#allocation2 + $0xf0] sm:$0xff]
    %v117 = vld [vmem:[#allocation2 + $0xf8] sm:$0xff]
    %v118 = vld [vmem:[#allocation2 + $0x100] sm:$0xff]
    %v119 = vld [vmem:[#allocation2 + $0x108] sm:$0xff]
    %v120 = vld [vmem:[#allocation2 + $0x110] sm:$0xff]
    %v121 = vld [vmem:[#allocation2 + $0x118] sm:$0xff]
    %v122 = vld [vmem:[#allocation2 + $0x120] sm:$0xff]
    %v123 = vld [vmem:[#allocation2 + $0x128] sm:$0xff]
    %v124 = vld [vmem:[#allocation2 + $0x130] sm:$0xff]
    %v125 = vld [vmem:[#allocation2 + $0x138] sm:$0xff]
    %v126 = vld [vmem:[#allocation2 + $0x140] sm:$0xff]
    %v127 = vld [vmem:[#allocation2 + $0x148] sm:$0xff]
    %v128 = vld [vmem:[#allocation2 + $0x150] sm:$0xff]
    %v129 = vld [vmem:[#allocation2 + $0x158] sm:$0xff]
    %v130 = vld [vmem:[#allocation2 + $0x160] sm:$0xff]
    %v131 = vld [vmem:[#allocation2 + $0x168] sm:$0xff]
    %v132 = vld [vmem:[#allocation2 + $0x170] sm:$0xff]
    %v133 = vld [vmem:[#allocation2 + $0x178] sm:$0xff]
    %v134 = vld [vmem:[#allocation2 + $0x180] sm:$0xff]
    %v135 = vld [vmem:[#allocation2 + $0x188] sm:$0xff]
    %v136 = vld [vmem:[#allocation2 + $0x190] sm:$0xff]
    %v137 = vld [vmem:[#allocation2 + $0x198] sm:$0xff]
    %v138 = vld [vmem:[#allocation2 + $0x1a0] sm:$0xff]
    %v139 = vld [vmem:[#allocation2 + $0x1a8] sm:$0xff]
    %v140 = vld [vmem:[#allocation2 + $0x1b0] sm:$0xff]
    %v141 = vld [vmem:[#allocation2 + $0x1b8] sm:$0xff]
    %v142 = vld [vmem:[#allocation2 + $0x1c0] sm:$0xff]
    %v143 = vld [vmem:[#allocation2 + $0x1c8] sm:$0xff]
    %v144 = vld [vmem:[#allocation2 + $0x1d0] sm:$0xff]
    %v145 = vld [vmem:[#allocation2 + $0x1d8] sm:$0xff]
    %v146 = vld [vmem:[#allocation2 + $0x1e0] sm:$0xff]
    %v147 = vld [vmem:[#allocation2 + $0x1e8] sm:$0xff]
    %v148 = vld [vmem:[#allocation2 + $0x1f0] sm:$0xff]
    %v149 = vld [vmem:[#allocation2 + $0x1f8] sm:$0xff]
    %v150 = vld [vmem:[#allocation2 + $0x200] sm:$0xff]
    %v151 = vld [vmem:[#allocation2 + $0x208] sm:$0xff]
    %v152 = vld [vmem:[#allocation2 + $0x210] sm:$0xff]
    %v153 = vld [vmem:[#allocation2 + $0x218] sm:$0xff]
    %v154 = vld [vmem:[#allocation2 + $0x220] sm:$0xff]
    %v155 = vld [vmem:[#allocation2 + $0x228] sm:$0xff]
    %v156 = vld [vmem:[#allocation2 + $0x230] sm:$0xff]
    %v157 = vld [vmem:[#allocation2 + $0x238] sm:$0xff]
    %v158 = vld [vmem:[#allocation2 + $0x240] sm:$0xff]
    %v159 = vld [vmem:[#allocation2 + $0x248] sm:$0xff]
    %v160 = vld [vmem:[#allocation2 + $0x250] sm:$0x33]
    %v161 = vld [vmem:[#allocation2 + $0x258] sm:$0x33]
    %v162 = vld [vmem:[%s2] sm:$0xf]
    %v164 = vlaneseq
    %v165 = vshrl.u32 %v164, 7
    %v166 = vsub.s32 0, %v165
    %v167 = vrot.slane %v162, %v166
    %v168 = vlaneseq
    %v169 = vshrl.u32 %v168, 7
    %v170 = vsub.s32 1, %v169
    %v171 = vrot.slane %v162, %v170
    %v172 = vlaneseq
    %v173 = vshrl.u32 %v172, 7
    %v174 = vsub.s32 2, %v173
    %v175 = vrot.slane %v162, %v174
    %v176 = vlaneseq
    %v177 = vshrl.u32 %v176, 7
    %v178 = vsub.s32 3, %v177
    %v179 = vrot.slane %v162, %v178
    %v260 = vunpack.c.l.b16 %v86
    %v261 = vunpack.c.h.b16 %v86
    %v262 = vunpack.c.l.b16 %v87
    %v263 = vunpack.c.h.b16 %v87
    %v264 = vunpack.c.l.b16 %v88
    %v265 = vunpack.c.h.b16 %v88
    %v266 = vunpack.c.l.b16 %v89
    %v267 = vunpack.c.h.b16 %v89
    %v268 = vunpack.c.l.b16 %v90
    %v269 = vunpack.c.h.b16 %v90
    %v270 = vunpack.c.l.b16 %v91
    %v271 = vunpack.c.h.b16 %v91
    %v272 = vunpack.c.l.b16 %v92
    %v273 = vunpack.c.h.b16 %v92
    %v274 = vunpack.c.l.b16 %v93
    %v275 = vunpack.c.h.b16 %v93
    %v276 = vunpack.c.l.b16 %v94
    %v277 = vunpack.c.h.b16 %v94
    %v278 = vunpack.c.l.b16 %v95
    %v279 = vunpack.c.h.b16 %v95
    %v280 = vunpack.c.l.b16 %v96
    %v281 = vunpack.c.h.b16 %v96
    %v282 = vunpack.c.l.b16 %v97
    %v283 = vunpack.c.h.b16 %v97
    %v284 = vunpack.c.l.b16 %v98
    %v285 = vunpack.c.h.b16 %v98
    %v286 = vunpack.c.l.b16 %v99
    %v287 = vunpack.c.h.b16 %v99
    %v288 = vunpack.c.l.b16 %v100
    %v289 = vunpack.c.h.b16 %v100
    %v290 = vunpack.c.l.b16 %v101
    %v291 = vunpack.c.h.b16 %v101
    %v292 = vunpack.c.l.b16 %v102
    %v293 = vunpack.c.h.b16 %v102
    %v294 = vunpack.c.l.b16 %v103
    %v295 = vunpack.c.h.b16 %v103
    %v296 = vunpack.c.l.b16 %v104
    %v297 = vunpack.c.h.b16 %v104
    %v298 = vunpack.c.l.b16 %v105
    %v299 = vunpack.c.h.b16 %v105
    %v300 = vunpack.c.l.b16 %v106
    %v301 = vunpack.c.h.b16 %v106
    %v302 = vunpack.c.l.b16 %v107
    %v303 = vunpack.c.h.b16 %v107
    %v304 = vunpack.c.l.b16 %v108
    %v305 = vunpack.c.h.b16 %v108
    %v306 = vunpack.c.l.b16 %v109
    %v307 = vunpack.c.h.b16 %v109
    %v308 = vunpack.c.l.b16 %v110
    %v309 = vunpack.c.h.b16 %v110
    %v310 = vunpack.c.l.b16 %v111
    %v311 = vunpack.c.h.b16 %v111
    %v312 = vunpack.c.l.b16 %v112
    %v313 = vunpack.c.h.b16 %v112
    %v314 = vunpack.c.l.b16 %v113
    %v315 = vunpack.c.h.b16 %v113
    %v316 = vunpack.c.l.b16 %v114
    %v317 = vunpack.c.h.b16 %v114
    %v318 = vunpack.c.l.b16 %v115
    %v319 = vunpack.c.h.b16 %v115
    %v320 = vunpack.c.l.b16 %v116
    %v321 = vunpack.c.h.b16 %v116
    %v322 = vunpack.c.l.b16 %v117
    %v323 = vunpack.c.h.b16 %v117
    %v324 = vunpack.c.l.b16 %v118
    %v325 = vunpack.c.h.b16 %v118
    %v326 = vunpack.c.l.b16 %v119
    %v327 = vunpack.c.h.b16 %v119
    %v328 = vunpack.c.l.b16 %v120
    %v329 = vunpack.c.h.b16 %v120
    %v330 = vunpack.c.l.b16 %v121
    %v331 = vunpack.c.h.b16 %v121
    %v332 = vunpack.c.l.b16 %v122
    %v333 = vunpack.c.h.b16 %v122
    %v334 = vunpack.c.l.b16 %v123
    %v335 = vunpack.c.h.b16 %v123
    %v336 = vunpack.c.l.b16 %v124
    %v337 = vunpack.c.h.b16 %v124
    %v338 = vunpack.c.l.b16 %v125
    %v339 = vunpack.c.h.b16 %v125
    %v340 = vunpack.c.l.b16 %v126
    %v341 = vunpack.c.h.b16 %v126
    %v342 = vunpack.c.l.b16 %v127
    %v343 = vunpack.c.h.b16 %v127
    %v344 = vunpack.c.l.b16 %v128
    %v345 = vunpack.c.h.b16 %v128
    %v346 = vunpack.c.l.b16 %v129
    %v347 = vunpack.c.h.b16 %v129
    %v348 = vunpack.c.l.b16 %v130
    %v349 = vunpack.c.h.b16 %v130
    %v350 = vunpack.c.l.b16 %v131
    %v351 = vunpack.c.h.b16 %v131
    %v352 = vunpack.c.l.b16 %v132
    %v353 = vunpack.c.h.b16 %v132
    %v354 = vunpack.c.l.b16 %v133
    %v355 = vunpack.c.h.b16 %v133
    %v356 = vunpack.c.l.b16 %v134
    %v357 = vunpack.c.h.b16 %v134
    %v358 = vunpack.c.l.b16 %v135
    %v359 = vunpack.c.h.b16 %v135
    %v360 = vunpack.c.l.b16 %v136
    %v361 = vunpack.c.h.b16 %v136
    %v362 = vunpack.c.l.b16 %v137
    %v363 = vunpack.c.h.b16 %v137
    %v364 = vunpack.c.l.b16 %v138
    %v365 = vunpack.c.h.b16 %v138
    %v366 = vunpack.c.l.b16 %v139
    %v367 = vunpack.c.h.b16 %v139
    %v368 = vunpack.c.l.b16 %v140
    %v369 = vunpack.c.h.b16 %v140
    %v370 = vunpack.c.l.b16 %v141
    %v371 = vunpack.c.h.b16 %v141
    %v372 = vunpack.c.l.b16 %v142
    %v373 = vunpack.c.h.b16 %v142
    %v374 = vunpack.c.l.b16 %v143
    %v375 = vunpack.c.h.b16 %v143
    %v376 = vunpack.c.l.b16 %v144
    %v377 = vunpack.c.h.b16 %v144
    %v378 = vunpack.c.l.b16 %v145
    %v379 = vunpack.c.h.b16 %v145
    %v380 = vunpack.c.l.b16 %v146
    %v381 = vunpack.c.h.b16 %v146
    %v382 = vunpack.c.l.b16 %v147
    %v383 = vunpack.c.h.b16 %v147
    %v384 = vunpack.c.l.b16 %v148
    %v385 = vunpack.c.h.b16 %v148
    %v386 = vunpack.c.l.b16 %v149
    %v387 = vunpack.c.h.b16 %v149
    %v388 = vunpack.c.l.b16 %v150
    %v389 = vunpack.c.h.b16 %v150
    %v390 = vunpack.c.l.b16 %v151
    %v391 = vunpack.c.h.b16 %v151
    %v392 = vunpack.c.l.b16 %v152
    %v393 = vunpack.c.h.b16 %v152
    %v394 = vunpack.c.l.b16 %v153
    %v395 = vunpack.c.h.b16 %v153
    %v396 = vunpack.c.l.b16 %v154
    %v397 = vunpack.c.h.b16 %v154
    %v398 = vunpack.c.l.b16 %v155
    %v399 = vunpack.c.h.b16 %v155
    %v400 = vunpack.c.l.b16 %v156
    %v401 = vunpack.c.h.b16 %v156
    %v402 = vunpack.c.l.b16 %v157
    %v403 = vunpack.c.h.b16 %v157
    %v404 = vunpack.c.l.b16 %v158
    %v405 = vunpack.c.h.b16 %v158
    %v406 = vunpack.c.l.b16 %v159
    %v407 = vunpack.c.h.b16 %v159
    %v408 = vunpack.c.l.b16 %v160
    %v409 = vunpack.c.h.b16 %v160
    %v410 = vunpack.c.l.b16 %v161
    %v411 = vunpack.c.h.b16 %v161
    %v412 = vpack.c.b16 %v264, %v260
    %v413 = vpack.c.b16 %v265, %v261
    %v414 = vpack.c.b16 %v266, %v262
    %v415 = vpack.c.b16 %v267, %v263
    %v416 = vpack.c.b16 %v272, %v268
    %v417 = vpack.c.b16 %v273, %v269
    %v418 = vpack.c.b16 %v274, %v270
    %v419 = vpack.c.b16 %v275, %v271
    %v420 = vpack.c.b16 %v280, %v276
    %v421 = vpack.c.b16 %v281, %v277
    %v422 = vpack.c.b16 %v282, %v278
    %v423 = vpack.c.b16 %v283, %v279
    %v424 = vpack.c.b16 %v288, %v284
    %v425 = vpack.c.b16 %v289, %v285
    %v426 = vpack.c.b16 %v290, %v286
    %v427 = vpack.c.b16 %v291, %v287
    %v428 = vpack.c.b16 %v296, %v292
    %v429 = vpack.c.b16 %v297, %v293
    %v430 = vpack.c.b16 %v298, %v294
    %v431 = vpack.c.b16 %v299, %v295
    %v432 = vpack.c.b16 %v304, %v300
    %v433 = vpack.c.b16 %v305, %v301
    %v434 = vpack.c.b16 %v306, %v302
    %v435 = vpack.c.b16 %v307, %v303
    %v436 = vpack.c.b16 %v312, %v308
    %v437 = vpack.c.b16 %v313, %v309
    %v438 = vpack.c.b16 %v314, %v310
    %v439 = vpack.c.b16 %v315, %v311
    %v440 = vpack.c.b16 %v320, %v316
    %v441 = vpack.c.b16 %v321, %v317
    %v442 = vpack.c.b16 %v322, %v318
    %v443 = vpack.c.b16 %v323, %v319
    %v444 = vpack.c.b16 %v328, %v324
    %v445 = vpack.c.b16 %v329, %v325
    %v446 = vpack.c.b16 %v330, %v326
    %v447 = vpack.c.b16 %v331, %v327
    %v448 = vpack.c.b16 %v336, %v332
    %v449 = vpack.c.b16 %v337, %v333
    %v450 = vpack.c.b16 %v338, %v334
    %v451 = vpack.c.b16 %v339, %v335
    %v452 = vpack.c.b16 %v344, %v340
    %v453 = vpack.c.b16 %v345, %v341
    %v454 = vpack.c.b16 %v346, %v342
    %v455 = vpack.c.b16 %v347, %v343
    %v456 = vpack.c.b16 %v352, %v348
    %v457 = vpack.c.b16 %v353, %v349
    %v458 = vpack.c.b16 %v354, %v350
    %v459 = vpack.c.b16 %v355, %v351
    %v460 = vpack.c.b16 %v360, %v356
    %v461 = vpack.c.b16 %v361, %v357
    %v462 = vpack.c.b16 %v362, %v358
    %v463 = vpack.c.b16 %v363, %v359
    %v464 = vpack.c.b16 %v368, %v364
    %v465 = vpack.c.b16 %v369, %v365
    %v466 = vpack.c.b16 %v370, %v366
    %v467 = vpack.c.b16 %v371, %v367
    %v468 = vpack.c.b16 %v376, %v372
    %v469 = vpack.c.b16 %v377, %v373
    %v470 = vpack.c.b16 %v378, %v374
    %v471 = vpack.c.b16 %v379, %v375
    %v472 = vpack.c.b16 %v384, %v380
    %v473 = vpack.c.b16 %v385, %v381
    %v474 = vpack.c.b16 %v386, %v382
    %v475 = vpack.c.b16 %v387, %v383
    %v476 = vpack.c.b16 %v392, %v388
    %v477 = vpack.c.b16 %v393, %v389
    %v478 = vpack.c.b16 %v394, %v390
    %v479 = vpack.c.b16 %v395, %v391
    %v480 = vpack.c.b16 %v400, %v396
    %v481 = vpack.c.b16 %v401, %v397
    %v482 = vpack.c.b16 %v402, %v398
    %v483 = vpack.c.b16 %v403, %v399
    %v484 = vpack.c.b16 %v408, %v404
    %v485 = vpack.c.b16 %v409, %v405
    %v486 = vpack.c.b16 %v410, %v406
    %v487 = vpack.c.b16 %v411, %v407
    %vm560 = vcmask 359424
    %v562 = vsel %vm560, %v85, 0
    %vm564 = vcmask 1045504
    %v566 = vsel %vm564, %v484, 0
    %v569 = vsel %vm564, %v485, 0
    %v572 = vsel %vm564, %v486, 0
    %v575 = vsel %vm564, %v487, 0
    %577 = vmatprep.subr.bf16.mxu0 %v441
    %578 = vmatpush1.bf16.msra.mxu0 %v440
    %579 = vmatprep.subr.bf16.mxu0 %v437
    %580 = vmatpush1.bf16.msra.mxu0 %v436
    %581 = vmatprep.subr.bf16.mxu0 %v433
    %582 = vmatpush1.bf16.msra.mxu0 %v432
    %583 = vmatprep.subr.bf16.mxu0 %v429
    %584 = vmatpush1.bf16.msra.mxu0 %v428
    %585 = vmatprep.subr.bf16.mxu0 %v425
    %586 = vmatpush1.bf16.msra.mxu0 %v424
    %587 = vmatprep.subr.bf16.mxu0 %v421
    %588 = vmatpush1.bf16.msra.mxu0 %v420
    %589 = vmatprep.subr.bf16.mxu0 %v417
    %590 = vmatpush1.bf16.msra.mxu0 %v416
    %591 = vmatprep.subr.bf16.mxu0 %v413
    %592 = vmatpush1.bf16.msra.mxu0 %v412
    %593 = vmatprep.subr.bf16.mxu0 %v473
    %594 = vmatpush2.bf16.msra.mxu0 %v472
    %595 = vmatprep.subr.bf16.mxu0 %v469
    %596 = vmatpush2.bf16.msra.mxu0 %v468
    %597 = vmatprep.subr.bf16.mxu0 %v465
    %598 = vmatpush2.bf16.msra.mxu0 %v464
    %599 = vmatprep.subr.bf16.mxu0 %v461
    %600 = vmatpush2.bf16.msra.mxu0 %v460
    %601 = vmatprep.subr.bf16.mxu0 %v457
    %602 = vmatpush2.bf16.msra.mxu0 %v456
    %603 = vmatprep.subr.bf16.mxu0 %v453
    %604 = vmatpush2.bf16.msra.mxu0 %v452
    %605 = vmatprep.subr.bf16.mxu0 %v449
    %606 = vmatpush2.bf16.msra.mxu0 %v448
    %607 = vmatprep.subr.bf16.mxu0 %v445
    %608 = vmatpush2.bf16.msra.mxu0 %v444
    %609 = vmatprep.mubr.bf16.mxu0 %v84
    %610 = vmatmul.mubr.bf16.gmra.mxu0 %v83
    %v611 = vpop.f32.mrf.mxu0
    %v612 = vadd.f32 %v167, %v611
    %v613 = vpop.f32.mrf.mxu0
    %v614 = vadd.f32 %v171, %v613
    %v615 = vpop.f32.mrf.mxu0
    %v616 = vadd.f32 %v167, %v615
    %v617 = vpop.f32.mrf.mxu0
    %v618 = vadd.f32 %v171, %v617
    %619 = vdwg.mxu0
    %620 = vmatprep.subr.bf16.mxu0 0
    %621 = vmatpush1.bf16.msra.mxu0 0
    %622 = vmatprep.subr.bf16.mxu0 0
    %623 = vmatpush1.bf16.msra.mxu0 0
    %624 = vmatprep.subr.bf16.mxu0 0
    %625 = vmatpush1.bf16.msra.mxu0 0
    %626 = vmatprep.subr.bf16.mxu0 0
    %627 = vmatpush1.bf16.msra.mxu0 0
    %628 = vmatprep.subr.bf16.mxu0 0
    %629 = vmatpush1.bf16.msra.mxu0 0
    %630 = vmatprep.subr.bf16.mxu0 %v569
    %631 = vmatpush1.bf16.msra.mxu0 %v566
    %632 = vmatprep.subr.bf16.mxu0 %v481
    %633 = vmatpush1.bf16.msra.mxu0 %v480
    %634 = vmatprep.subr.bf16.mxu0 %v477
    %635 = vmatpush1.bf16.msra.mxu0 %v476
    %636 = vmatprep.subr.bf16.mxu0 0
    %637 = vmatpush2.bf16.msra.mxu0 0
    %638 = vmatprep.subr.bf16.mxu0 0
    %639 = vmatpush2.bf16.msra.mxu0 0
    %640 = vmatprep.subr.bf16.mxu0 0
    %641 = vmatpush2.bf16.msra.mxu0 0
    %642 = vmatprep.subr.bf16.mxu0 0
    %643 = vmatpush2.bf16.msra.mxu0 0
    %644 = vmatprep.subr.bf16.mxu0 0
    %645 = vmatpush2.bf16.msra.mxu0 0
    %646 = vmatprep.subr.bf16.mxu0 0
    %647 = vmatpush2.bf16.msra.mxu0 0
    %648 = vmatprep.subr.bf16.mxu0 0
    %649 = vmatpush2.bf16.msra.mxu0 0
    %650 = vmatprep.subr.bf16.mxu0 0
    %651 = vmatpush2.bf16.msra.mxu0 0
    %652 = vmatprep.mubr.bf16.mxu0 0
    %653 = vmatmul.mubr.bf16.gmra.mxu0 %v562
    %v654 = vpop.f32.mrf.mxu0
    %v655 = vadd.f32 %v612, %v654
    %v656 = vpop.f32.mrf.mxu0
    %v657 = vadd.f32 %v614, %v656
    %v658 = vpop.f32.mrf.mxu0
    %v659 = vadd.f32 %v616, %v658
    %v660 = vpop.f32.mrf.mxu0
    %v661 = vadd.f32 %v618, %v660
    %662 = vdwg.mxu0
    %663 = vmatprep.subr.bf16.mxu0 %v443
    %664 = vmatpush1.bf16.msra.mxu0 %v442
    %665 = vmatprep.subr.bf16.mxu0 %v439
    %666 = vmatpush1.bf16.msra.mxu0 %v438
    %667 = vmatprep.subr.bf16.mxu0 %v435
    %668 = vmatpush1.bf16.msra.mxu0 %v434
    %669 = vmatprep.subr.bf16.mxu0 %v431
    %670 = vmatpush1.bf16.msra.mxu0 %v430
    %671 = vmatprep.subr.bf16.mxu0 %v427
    %672 = vmatpush1.bf16.msra.mxu0 %v426
    %673 = vmatprep.subr.bf16.mxu0 %v423
    %674 = vmatpush1.bf16.msra.mxu0 %v422
    %675 = vmatprep.subr.bf16.mxu0 %v419
    %676 = vmatpush1.bf16.msra.mxu0 %v418
    %677 = vmatprep.subr.bf16.mxu0 %v415
    %678 = vmatpush1.bf16.msra.mxu0 %v414
    %679 = vmatprep.subr.bf16.mxu0 %v475
    %680 = vmatpush2.bf16.msra.mxu0 %v474
    %681 = vmatprep.subr.bf16.mxu0 %v471
    %682 = vmatpush2.bf16.msra.mxu0 %v470
    %683 = vmatprep.subr.bf16.mxu0 %v467
    %684 = vmatpush2.bf16.msra.mxu0 %v466
    %685 = vmatprep.subr.bf16.mxu0 %v463
    %686 = vmatpush2.bf16.msra.mxu0 %v462
    %687 = vmatprep.subr.bf16.mxu0 %v459
    %688 = vmatpush2.bf16.msra.mxu0 %v458
    %689 = vmatprep.subr.bf16.mxu0 %v455
    %690 = vmatpush2.bf16.msra.mxu0 %v454
    %691 = vmatprep.subr.bf16.mxu0 %v451
    %692 = vmatpush2.bf16.msra.mxu0 %v450
    %693 = vmatprep.subr.bf16.mxu0 %v447
    %694 = vmatpush2.bf16.msra.mxu0 %v446
    %695 = vmatprep.mubr.bf16.mxu0 %v84
    %696 = vmatmul.mubr.bf16.gmra.mxu0 %v83
    %v697 = vpop.f32.mrf.mxu0
    %v698 = vadd.f32 %v175, %v697
    %v699 = vpop.f32.mrf.mxu0
    %v700 = vadd.f32 %v179, %v699
    %v701 = vpop.f32.mrf.mxu0
    %v702 = vadd.f32 %v175, %v701
    %v703 = vpop.f32.mrf.mxu0
    %v704 = vadd.f32 %v179, %v703
    %705 = vdwg.mxu0
    %706 = vmatprep.subr.bf16.mxu0 0
    %707 = vmatpush1.bf16.msra.mxu0 0
    %708 = vmatprep.subr.bf16.mxu0 0
    %709 = vmatpush1.bf16.msra.mxu0 0
    %710 = vmatprep.subr.bf16.mxu0 0
    %711 = vmatpush1.bf16.msra.mxu0 0
    %712 = vmatprep.subr.bf16.mxu0 0
    %713 = vmatpush1.bf16.msra.mxu0 0
    %714 = vmatprep.subr.bf16.mxu0 0
    %715 = vmatpush1.bf16.msra.mxu0 0
    %716 = vmatprep.subr.bf16.mxu0 %v575
    %717 = vmatpush1.bf16.msra.mxu0 %v572
    %718 = vmatprep.subr.bf16.mxu0 %v483
    %719 = vmatpush1.bf16.msra.mxu0 %v482
    %720 = vmatprep.subr.bf16.mxu0 %v479
    %721 = vmatpush1.bf16.msra.mxu0 %v478
    %722 = vmatprep.subr.bf16.mxu0 0
    %723 = vmatpush2.bf16.msra.mxu0 0
    %724 = vmatprep.subr.bf16.mxu0 0
    %725 = vmatpush2.bf16.msra.mxu0 0
    %726 = vmatprep.subr.bf16.mxu0 0
    %727 = vmatpush2.bf16.msra.mxu0 0
    %728 = vmatprep.subr.bf16.mxu0 0
    %729 = vmatpush2.bf16.msra.mxu0 0
    %730 = vmatprep.subr.bf16.mxu0 0
    %731 = vmatpush2.bf16.msra.mxu0 0
    %732 = vmatprep.subr.bf16.mxu0 0
    %733 = vmatpush2.bf16.msra.mxu0 0
    %734 = vmatprep.subr.bf16.mxu0 0
    %735 = vmatpush2.bf16.msra.mxu0 0
    %736 = vmatprep.subr.bf16.mxu0 0
    %737 = vmatpush2.bf16.msra.mxu0 0
    %738 = vmatprep.mubr.bf16.mxu0 0
    %739 = vmatmul.mubr.bf16.gmra.mxu0 %v562
    %v740 = vpop.f32.mrf.mxu0
    %v741 = vadd.f32 %v698, %v740
    %v742 = vpop.f32.mrf.mxu0
    %v743 = vadd.f32 %v700, %v742
    %v744 = vpop.f32.mrf.mxu0
    %v745 = vadd.f32 %v702, %v744
    %v746 = vpop.f32.mrf.mxu0
    %v747 = vadd.f32 %v704, %v746
    %748 = vdwg.mxu0
    %v749 = vmax.f32 %v655, 0.0
    %v750 = vmax.f32 %v657, 0.0
    %v751 = vmax.f32 %v741, 0.0
    %v752 = vmax.f32 %v743, 0.0
    %v753 = vmax.f32 %v659, 0.0
    %v754 = vmax.f32 %v661, 0.0
    %v755 = vmax.f32 %v745, 0.0
    %v756 = vmax.f32 %v747, 0.0
    %v757 = vpack.c.bf16 %v753, %v749
    %v758 = vpack.c.bf16 %v754, %v750
    %v759 = vpack.c.bf16 %v755, %v751
    %v760 = vpack.c.bf16 %v756, %v752
    %v761 = vld [vmem:[#allocation4] sm:$0xff]
    %v762 = vld [vmem:[#allocation4 + $0x8] sm:$0xff]
    %v763 = vld [vmem:[#allocation4 + $0x10] sm:$0xff]
    %v764 = vld [vmem:[#allocation4 + $0x18] sm:$0xff]
    %v765 = vld [vmem:[#allocation4 + $0x20] sm:$0xff]
    %v766 = vld [vmem:[#allocation4 + $0x28] sm:$0xff]
    %v767 = vld [vmem:[#allocation4 + $0x30] sm:$0xff]
    %v768 = vld [vmem:[#allocation4 + $0x38] sm:$0xff]
    %v769 = vld [vmem:[#allocation4 + $0x40] sm:$0xff]
    %v770 = vld [vmem:[#allocation4 + $0x48] sm:$0xff]
    %v771 = vld [vmem:[#allocation4 + $0x50] sm:$0xff]
    %v772 = vld [vmem:[#allocation4 + $0x58] sm:$0xff]
    %v773 = vld [vmem:[#allocation4 + $0x60] sm:$0xff]
    %v774 = vld [vmem:[#allocation4 + $0x68] sm:$0xff]
    %v775 = vld [vmem:[#allocation4 + $0x70] sm:$0xff]
    %v776 = vld [vmem:[#allocation4 + $0x78] sm:$0xff]
    %v777 = vld [vmem:[#allocation4 + $0x80] sm:$0xff]
    %v778 = vld [vmem:[#allocation4 + $0x88] sm:$0xff]
    %v779 = vld [vmem:[#allocation4 + $0x90] sm:$0xff]
    %v780 = vld [vmem:[#allocation4 + $0x98] sm:$0xff]
    %v781 = vld [vmem:[#allocation4 + $0xa0] sm:$0xff]
    %v782 = vld [vmem:[#allocation4 + $0xa8] sm:$0xff]
    %v783 = vld [vmem:[#allocation4 + $0xb0] sm:$0xff]
    %v784 = vld [vmem:[#allocation4 + $0xb8] sm:$0xff]
    %v785 = vld [vmem:[#allocation4 + $0xc0] sm:$0xff]
    %v786 = vld [vmem:[#allocation4 + $0xc8] sm:$0xff]
    %v787 = vld [vmem:[#allocation4 + $0xd0] sm:$0xff]
    %v788 = vld [vmem:[#allocation4 + $0xd8] sm:$0xff]
    %v789 = vld [vmem:[#allocation4 + $0xe0] sm:$0xff]
    %v790 = vld [vmem:[#allocation4 + $0xe8] sm:$0xff]
    %v791 = vld [vmem:[#allocation4 + $0xf0] sm:$0xff]
    %v792 = vld [vmem:[#allocation4 + $0xf8] sm:$0xff]
    %v793 = vld [vmem:[#allocation4 + $0x100] sm:$0xff]
    %v794 = vld [vmem:[#allocation4 + $0x108] sm:$0xff]
    %v795 = vld [vmem:[#allocation4 + $0x110] sm:$0xff]
    %v796 = vld [vmem:[#allocation4 + $0x118] sm:$0xff]
    %v797 = vld [vmem:[#allocation4 + $0x120] sm:$0xff]
    %v798 = vld [vmem:[#allocation4 + $0x128] sm:$0xff]
    %v799 = vld [vmem:[#allocation4 + $0x130] sm:$0xff]
    %v800 = vld [vmem:[#allocation4 + $0x138] sm:$0xff]
    %v801 = vld [vmem:[#allocation4 + $0x140] sm:$0xff]
    %v802 = vld [vmem:[#allocation4 + $0x148] sm:$0xff]
    %v803 = vld [vmem:[#allocation4 + $0x150] sm:$0xff]
    %v804 = vld [vmem:[#allocation4 + $0x158] sm:$0xff]
    %v805 = vld [vmem:[#allocation4 + $0x160] sm:$0xff]
    %v806 = vld [vmem:[#allocation4 + $0x168] sm:$0xff]
    %v807 = vld [vmem:[#allocation4 + $0x170] sm:$0xff]
    %v808 = vld [vmem:[#allocation4 + $0x178] sm:$0xff]
    %v809 = vld [vmem:[#allocation4 + $0x180] sm:$0xff]
    %v810 = vld [vmem:[#allocation4 + $0x188] sm:$0xff]
    %v811 = vld [vmem:[#allocation4 + $0x190] sm:$0xff]
    %v812 = vld [vmem:[#allocation4 + $0x198] sm:$0xff]
    %v813 = vld [vmem:[#allocation4 + $0x1a0] sm:$0xff]
    %v814 = vld [vmem:[#allocation4 + $0x1a8] sm:$0xff]
    %v815 = vld [vmem:[#allocation4 + $0x1b0] sm:$0xff]
    %v816 = vld [vmem:[#allocation4 + $0x1b8] sm:$0xff]
    %v817 = vld [vmem:[#allocation4 + $0x1c0] sm:$0xff]
    %v818 = vld [vmem:[#allocation4 + $0x1c8] sm:$0xff]
    %v819 = vld [vmem:[#allocation4 + $0x1d0] sm:$0xff]
    %v820 = vld [vmem:[#allocation4 + $0x1d8] sm:$0xff]
    %v821 = vld [vmem:[#allocation4 + $0x1e0] sm:$0xff]
    %v822 = vld [vmem:[#allocation4 + $0x1e8] sm:$0xff]
    %v823 = vld [vmem:[#allocation4 + $0x1f0] sm:$0xff]
    %v824 = vld [vmem:[#allocation4 + $0x1f8] sm:$0xff]
    %v825 = vld [vmem:[#allocation4 + $0x200] sm:$0xff]
    %v826 = vld [vmem:[#allocation4 + $0x208] sm:$0xff]
    %v827 = vld [vmem:[#allocation4 + $0x210] sm:$0xff]
    %v828 = vld [vmem:[#allocation4 + $0x218] sm:$0xff]
    %v829 = vld [vmem:[#allocation4 + $0x220] sm:$0xff]
    %v830 = vld [vmem:[#allocation4 + $0x228] sm:$0xff]
    %v831 = vld [vmem:[#allocation4 + $0x230] sm:$0xff]
    %v832 = vld [vmem:[#allocation4 + $0x238] sm:$0xff]
    %v833 = vld [vmem:[#allocation4 + $0x240] sm:$0xff]
    %v834 = vld [vmem:[#allocation4 + $0x248] sm:$0xff]
    %v835 = vld [vmem:[#allocation4 + $0x250] sm:$0xff]
    %v836 = vld [vmem:[#allocation4 + $0x258] sm:$0xff]
    %v837 = vld [vmem:[#allocation4 + $0x260] sm:$0xff]
    %v838 = vld [vmem:[#allocation4 + $0x268] sm:$0xff]
    %v839 = vld [vmem:[#allocation4 + $0x270] sm:$0xff]
    %v840 = vld [vmem:[#allocation4 + $0x278] sm:$0xff]
    %v841 = vld [vmem:[#allocation4 + $0x280] sm:$0xff]
    %v842 = vld [vmem:[#allocation4 + $0x288] sm:$0xff]
    %v843 = vld [vmem:[#allocation4 + $0x290] sm:$0xff]
    %v844 = vld [vmem:[#allocation4 + $0x298] sm:$0xff]
    %v845 = vld [vmem:[#allocation4 + $0x2a0] sm:$0xff]
    %v846 = vld [vmem:[#allocation4 + $0x2a8] sm:$0xff]
    %v847 = vld [vmem:[#allocation4 + $0x2b0] sm:$0xff]
    %v848 = vld [vmem:[#allocation4 + $0x2b8] sm:$0xff]
    %v849 = vld [vmem:[#allocation4 + $0x2c0] sm:$0xff]
    %v850 = vld [vmem:[#allocation4 + $0x2c8] sm:$0xff]
    %v851 = vld [vmem:[#allocation4 + $0x2d0] sm:$0xff]
    %v852 = vld [vmem:[#allocation4 + $0x2d8] sm:$0xff]
    %v853 = vld [vmem:[#allocation4 + $0x2e0] sm:$0xff]
    %v854 = vld [vmem:[#allocation4 + $0x2e8] sm:$0xff]
    %v855 = vld [vmem:[#allocation4 + $0x2f0] sm:$0xff]
    %v856 = vld [vmem:[#allocation4 + $0x2f8] sm:$0xff]
    %v857 = vld [vmem:[#allocation4 + $0x300] sm:$0xff]
    %v858 = vld [vmem:[#allocation4 + $0x308] sm:$0xff]
    %v859 = vld [vmem:[#allocation4 + $0x310] sm:$0xff]
    %v860 = vld [vmem:[#allocation4 + $0x318] sm:$0xff]
    %v861 = vld [vmem:[#allocation4 + $0x320] sm:$0xff]
    %v862 = vld [vmem:[#allocation4 + $0x328] sm:$0xff]
    %v863 = vld [vmem:[#allocation4 + $0x330] sm:$0xff]
    %v864 = vld [vmem:[#allocation4 + $0x338] sm:$0xff]
    %v865 = vld [vmem:[#allocation4 + $0x340] sm:$0xff]
    %v866 = vld [vmem:[#allocation4 + $0x348] sm:$0xff]
    %v867 = vld [vmem:[#allocation4 + $0x350] sm:$0xff]
    %v868 = vld [vmem:[#allocation4 + $0x358] sm:$0xff]
    %v869 = vld [vmem:[#allocation4 + $0x360] sm:$0xff]
    %v870 = vld [vmem:[#allocation4 + $0x368] sm:$0xff]
    %v871 = vld [vmem:[#allocation4 + $0x370] sm:$0xff]
    %v872 = vld [vmem:[#allocation4 + $0x378] sm:$0xff]
    %v873 = vld [vmem:[#allocation4 + $0x380] sm:$0xff]
    %v874 = vld [vmem:[#allocation4 + $0x388] sm:$0xff]
    %v875 = vld [vmem:[#allocation4 + $0x390] sm:$0xff]
    %v876 = vld [vmem:[#allocation4 + $0x398] sm:$0xff]
    %v877 = vld [vmem:[#allocation4 + $0x3a0] sm:$0xff]
    %v878 = vld [vmem:[#allocation4 + $0x3a8] sm:$0xff]
    %v879 = vld [vmem:[#allocation4 + $0x3b0] sm:$0xff]
    %v880 = vld [vmem:[#allocation4 + $0x3b8] sm:$0xff]
    %v881 = vld [vmem:[#allocation4 + $0x3c0] sm:$0xff]
    %v882 = vld [vmem:[#allocation4 + $0x3c8] sm:$0xff]
    %v883 = vld [vmem:[#allocation4 + $0x3d0] sm:$0xff]
    %v884 = vld [vmem:[#allocation4 + $0x3d8] sm:$0xff]
    %v885 = vld [vmem:[#allocation4 + $0x3e0] sm:$0xff]
    %v886 = vld [vmem:[#allocation4 + $0x3e8] sm:$0xff]
    %v887 = vld [vmem:[#allocation4 + $0x3f0] sm:$0xff]
    %v888 = vld [vmem:[#allocation4 + $0x3f8] sm:$0xff]
    %v889 = vld [vmem:[%s4] sm:$0xf]
    %v891 = vlaneseq
    %v892 = vshrl.u32 %v891, 7
    %v893 = vsub.s32 0, %v892
    %v894 = vrot.slane %v889, %v893
    %v895 = vlaneseq
    %v896 = vshrl.u32 %v895, 7
    %v897 = vsub.s32 1, %v896
    %v898 = vrot.slane %v889, %v897
    %v899 = vlaneseq
    %v900 = vshrl.u32 %v899, 7
    %v901 = vsub.s32 2, %v900
    %v902 = vrot.slane %v889, %v901
    %v903 = vlaneseq
    %v904 = vshrl.u32 %v903, 7
    %v905 = vsub.s32 3, %v904
    %v906 = vrot.slane %v889, %v905
    %v1039 = vunpack.c.l.b16 %v761
    %v1040 = vunpack.c.h.b16 %v761
    %v1041 = vunpack.c.l.b16 %v762
    %v1042 = vunpack.c.h.b16 %v762
    %v1043 = vunpack.c.l.b16 %v763
    %v1044 = vunpack.c.h.b16 %v763
    %v1045 = vunpack.c.l.b16 %v764
    %v1046 = vunpack.c.h.b16 %v764
    %v1047 = vunpack.c.l.b16 %v765
    %v1048 = vunpack.c.h.b16 %v765
    %v1049 = vunpack.c.l.b16 %v766
    %v1050 = vunpack.c.h.b16 %v766
    %v1051 = vunpack.c.l.b16 %v767
    %v1052 = vunpack.c.h.b16 %v767
    %v1053 = vunpack.c.l.b16 %v768
    %v1054 = vunpack.c.h.b16 %v768
    %v1055 = vunpack.c.l.b16 %v769
    %v1056 = vunpack.c.h.b16 %v769
    %v1057 = vunpack.c.l.b16 %v770
    %v1058 = vunpack.c.h.b16 %v770
    %v1059 = vunpack.c.l.b16 %v771
    %v1060 = vunpack.c.h.b16 %v771
    %v1061 = vunpack.c.l.b16 %v772
    %v1062 = vunpack.c.h.b16 %v772
    %v1063 = vunpack.c.l.b16 %v773
    %v1064 = vunpack.c.h.b16 %v773
    %v1065 = vunpack.c.l.b16 %v774
    %v1066 = vunpack.c.h.b16 %v774
    %v1067 = vunpack.c.l.b16 %v775
    %v1068 = vunpack.c.h.b16 %v775
    %v1069 = vunpack.c.l.b16 %v776
    %v1070 = vunpack.c.h.b16 %v776
    %v1071 = vunpack.c.l.b16 %v777
    %v1072 = vunpack.c.h.b16 %v777
    %v1073 = vunpack.c.l.b16 %v778
    %v1074 = vunpack.c.h.b16 %v778
    %v1075 = vunpack.c.l.b16 %v779
    %v1076 = vunpack.c.h.b16 %v779
    %v1077 = vunpack.c.l.b16 %v780
    %v1078 = vunpack.c.h.b16 %v780
    %v1079 = vunpack.c.l.b16 %v781
    %v1080 = vunpack.c.h.b16 %v781
    %v1081 = vunpack.c.l.b16 %v782
    %v1082 = vunpack.c.h.b16 %v782
    %v1083 = vunpack.c.l.b16 %v783
    %v1084 = vunpack.c.h.b16 %v783
    %v1085 = vunpack.c.l.b16 %v784
    %v1086 = vunpack.c.h.b16 %v784
    %v1087 = vunpack.c.l.b16 %v785
    %v1088 = vunpack.c.h.b16 %v785
    %v1089 = vunpack.c.l.b16 %v786
    %v1090 = vunpack.c.h.b16 %v786
    %v1091 = vunpack.c.l.b16 %v787
    %v1092 = vunpack.c.h.b16 %v787
    %v1093 = vunpack.c.l.b16 %v788
    %v1094 = vunpack.c.h.b16 %v788
    %v1095 = vunpack.c.l.b16 %v789
    %v1096 = vunpack.c.h.b16 %v789
    %v1097 = vunpack.c.l.b16 %v790
    %v1098 = vunpack.c.h.b16 %v790
    %v1099 = vunpack.c.l.b16 %v791
    %v1100 = vunpack.c.h.b16 %v791
    %v1101 = vunpack.c.l.b16 %v792
    %v1102 = vunpack.c.h.b16 %v792
    %v1103 = vunpack.c.l.b16 %v793
    %v1104 = vunpack.c.h.b16 %v793
    %v1105 = vunpack.c.l.b16 %v794
    %v1106 = vunpack.c.h.b16 %v794
    %v1107 = vunpack.c.l.b16 %v795
    %v1108 = vunpack.c.h.b16 %v795
    %v1109 = vunpack.c.l.b16 %v796
    %v1110 = vunpack.c.h.b16 %v796
    %v1111 = vunpack.c.l.b16 %v797
    %v1112 = vunpack.c.h.b16 %v797
    %v1113 = vunpack.c.l.b16 %v798
    %v1114 = vunpack.c.h.b16 %v798
    %v1115 = vunpack.c.l.b16 %v799
    %v1116 = vunpack.c.h.b16 %v799
    %v1117 = vunpack.c.l.b16 %v800
    %v1118 = vunpack.c.h.b16 %v800
    %v1119 = vunpack.c.l.b16 %v801
    %v1120 = vunpack.c.h.b16 %v801
    %v1121 = vunpack.c.l.b16 %v802
    %v1122 = vunpack.c.h.b16 %v802
    %v1123 = vunpack.c.l.b16 %v803
    %v1124 = vunpack.c.h.b16 %v803
    %v1125 = vunpack.c.l.b16 %v804
    %v1126 = vunpack.c.h.b16 %v804
    %v1127 = vunpack.c.l.b16 %v805
    %v1128 = vunpack.c.h.b16 %v805
    %v1129 = vunpack.c.l.b16 %v806
    %v1130 = vunpack.c.h.b16 %v806
    %v1131 = vunpack.c.l.b16 %v807
    %v1132 = vunpack.c.h.b16 %v807
    %v1133 = vunpack.c.l.b16 %v808
    %v1134 = vunpack.c.h.b16 %v808
    %v1135 = vunpack.c.l.b16 %v809
    %v1136 = vunpack.c.h.b16 %v809
    %v1137 = vunpack.c.l.b16 %v810
    %v1138 = vunpack.c.h.b16 %v810
    %v1139 = vunpack.c.l.b16 %v811
    %v1140 = vunpack.c.h.b16 %v811
    %v1141 = vunpack.c.l.b16 %v812
    %v1142 = vunpack.c.h.b16 %v812
    %v1143 = vunpack.c.l.b16 %v813
    %v1144 = vunpack.c.h.b16 %v813
    %v1145 = vunpack.c.l.b16 %v814
    %v1146 = vunpack.c.h.b16 %v814
    %v1147 = vunpack.c.l.b16 %v815
    %v1148 = vunpack.c.h.b16 %v815
    %v1149 = vunpack.c.l.b16 %v816
    %v1150 = vunpack.c.h.b16 %v816
    %v1151 = vunpack.c.l.b16 %v817
    %v1152 = vunpack.c.h.b16 %v817
    %v1153 = vunpack.c.l.b16 %v818
    %v1154 = vunpack.c.h.b16 %v818
    %v1155 = vunpack.c.l.b16 %v819
    %v1156 = vunpack.c.h.b16 %v819
    %v1157 = vunpack.c.l.b16 %v820
    %v1158 = vunpack.c.h.b16 %v820
    %v1159 = vunpack.c.l.b16 %v821
    %v1160 = vunpack.c.h.b16 %v821
    %v1161 = vunpack.c.l.b16 %v822
    %v1162 = vunpack.c.h.b16 %v822
    %v1163 = vunpack.c.l.b16 %v823
    %v1164 = vunpack.c.h.b16 %v823
    %v1165 = vunpack.c.l.b16 %v824
    %v1166 = vunpack.c.h.b16 %v824
    %v1167 = vunpack.c.l.b16 %v825
    %v1168 = vunpack.c.h.b16 %v825
    %v1169 = vunpack.c.l.b16 %v826
    %v1170 = vunpack.c.h.b16 %v826
    %v1171 = vunpack.c.l.b16 %v827
    %v1172 = vunpack.c.h.b16 %v827
    %v1173 = vunpack.c.l.b16 %v828
    %v1174 = vunpack.c.h.b16 %v828
    %v1175 = vunpack.c.l.b16 %v829
    %v1176 = vunpack.c.h.b16 %v829
    %v1177 = vunpack.c.l.b16 %v830
    %v1178 = vunpack.c.h.b16 %v830
    %v1179 = vunpack.c.l.b16 %v831
    %v1180 = vunpack.c.h.b16 %v831
    %v1181 = vunpack.c.l.b16 %v832
    %v1182 = vunpack.c.h.b16 %v832
    %v1183 = vunpack.c.l.b16 %v833
    %v1184 = vunpack.c.h.b16 %v833
    %v1185 = vunpack.c.l.b16 %v834
    %v1186 = vunpack.c.h.b16 %v834
    %v1187 = vunpack.c.l.b16 %v835
    %v1188 = vunpack.c.h.b16 %v835
    %v1189 = vunpack.c.l.b16 %v836
    %v1190 = vunpack.c.h.b16 %v836
    %v1191 = vunpack.c.l.b16 %v837
    %v1192 = vunpack.c.h.b16 %v837
    %v1193 = vunpack.c.l.b16 %v838
    %v1194 = vunpack.c.h.b16 %v838
    %v1195 = vunpack.c.l.b16 %v839
    %v1196 = vunpack.c.h.b16 %v839
    %v1197 = vunpack.c.l.b16 %v840
    %v1198 = vunpack.c.h.b16 %v840
    %v1199 = vunpack.c.l.b16 %v841
    %v1200 = vunpack.c.h.b16 %v841
    %v1201 = vunpack.c.l.b16 %v842
    %v1202 = vunpack.c.h.b16 %v842
    %v1203 = vunpack.c.l.b16 %v843
    %v1204 = vunpack.c.h.b16 %v843
    %v1205 = vunpack.c.l.b16 %v844
    %v1206 = vunpack.c.h.b16 %v844
    %v1207 = vunpack.c.l.b16 %v845
    %v1208 = vunpack.c.h.b16 %v845
    %v1209 = vunpack.c.l.b16 %v846
    %v1210 = vunpack.c.h.b16 %v846
    %v1211 = vunpack.c.l.b16 %v847
    %v1212 = vunpack.c.h.b16 %v847
    %v1213 = vunpack.c.l.b16 %v848
    %v1214 = vunpack.c.h.b16 %v848
    %v1215 = vunpack.c.l.b16 %v849
    %v1216 = vunpack.c.h.b16 %v849
    %v1217 = vunpack.c.l.b16 %v850
    %v1218 = vunpack.c.h.b16 %v850
    %v1219 = vunpack.c.l.b16 %v851
    %v1220 = vunpack.c.h.b16 %v851
    %v1221 = vunpack.c.l.b16 %v852
    %v1222 = vunpack.c.h.b16 %v852
    %v1223 = vunpack.c.l.b16 %v853
    %v1224 = vunpack.c.h.b16 %v853
    %v1225 = vunpack.c.l.b16 %v854
    %v1226 = vunpack.c.h.b16 %v854
    %v1227 = vunpack.c.l.b16 %v855
    %v1228 = vunpack.c.h.b16 %v855
    %v1229 = vunpack.c.l.b16 %v856
    %v1230 = vunpack.c.h.b16 %v856
    %v1231 = vunpack.c.l.b16 %v857
    %v1232 = vunpack.c.h.b16 %v857
    %v1233 = vunpack.c.l.b16 %v858
    %v1234 = vunpack.c.h.b16 %v858
    %v1235 = vunpack.c.l.b16 %v859
    %v1236 = vunpack.c.h.b16 %v859
    %v1237 = vunpack.c.l.b16 %v860
    %v1238 = vunpack.c.h.b16 %v860
    %v1239 = vunpack.c.l.b16 %v861
    %v1240 = vunpack.c.h.b16 %v861
    %v1241 = vunpack.c.l.b16 %v862
    %v1242 = vunpack.c.h.b16 %v862
    %v1243 = vunpack.c.l.b16 %v863
    %v1244 = vunpack.c.h.b16 %v863
    %v1245 = vunpack.c.l.b16 %v864
    %v1246 = vunpack.c.h.b16 %v864
    %v1247 = vunpack.c.l.b16 %v865
    %v1248 = vunpack.c.h.b16 %v865
    %v1249 = vunpack.c.l.b16 %v866
    %v1250 = vunpack.c.h.b16 %v866
    %v1251 = vunpack.c.l.b16 %v867
    %v1252 = vunpack.c.h.b16 %v867
    %v1253 = vunpack.c.l.b16 %v868
    %v1254 = vunpack.c.h.b16 %v868
    %v1255 = vunpack.c.l.b16 %v869
    %v1256 = vunpack.c.h.b16 %v869
    %v1257 = vunpack.c.l.b16 %v870
    %v1258 = vunpack.c.h.b16 %v870
    %v1259 = vunpack.c.l.b16 %v871
    %v1260 = vunpack.c.h.b16 %v871
    %v1261 = vunpack.c.l.b16 %v872
    %v1262 = vunpack.c.h.b16 %v872
    %v1263 = vunpack.c.l.b16 %v873
    %v1264 = vunpack.c.h.b16 %v873
    %v1265 = vunpack.c.l.b16 %v874
    %v1266 = vunpack.c.h.b16 %v874
    %v1267 = vunpack.c.l.b16 %v875
    %v1268 = vunpack.c.h.b16 %v875
    %v1269 = vunpack.c.l.b16 %v876
    %v1270 = vunpack.c.h.b16 %v876
    %v1271 = vunpack.c.l.b16 %v877
    %v1272 = vunpack.c.h.b16 %v877
    %v1273 = vunpack.c.l.b16 %v878
    %v1274 = vunpack.c.h.b16 %v878
    %v1275 = vunpack.c.l.b16 %v879
    %v1276 = vunpack.c.h.b16 %v879
    %v1277 = vunpack.c.l.b16 %v880
    %v1278 = vunpack.c.h.b16 %v880
    %v1279 = vunpack.c.l.b16 %v881
    %v1280 = vunpack.c.h.b16 %v881
    %v1281 = vunpack.c.l.b16 %v882
    %v1282 = vunpack.c.h.b16 %v882
    %v1283 = vunpack.c.l.b16 %v883
    %v1284 = vunpack.c.h.b16 %v883
    %v1285 = vunpack.c.l.b16 %v884
    %v1286 = vunpack.c.h.b16 %v884
    %v1287 = vunpack.c.l.b16 %v885
    %v1288 = vunpack.c.h.b16 %v885
    %v1289 = vunpack.c.l.b16 %v886
    %v1290 = vunpack.c.h.b16 %v886
    %v1291 = vunpack.c.l.b16 %v887
    %v1292 = vunpack.c.h.b16 %v887
    %v1293 = vunpack.c.l.b16 %v888
    %v1294 = vunpack.c.h.b16 %v888
    %v1295 = vpack.c.b16 %v1043, %v1039
    %v1296 = vpack.c.b16 %v1044, %v1040
    %v1297 = vpack.c.b16 %v1045, %v1041
    %v1298 = vpack.c.b16 %v1046, %v1042
    %v1299 = vpack.c.b16 %v1051, %v1047
    %v1300 = vpack.c.b16 %v1052, %v1048
    %v1301 = vpack.c.b16 %v1053, %v1049
    %v1302 = vpack.c.b16 %v1054, %v1050
    %v1303 = vpack.c.b16 %v1059, %v1055
    %v1304 = vpack.c.b16 %v1060, %v1056
    %v1305 = vpack.c.b16 %v1061, %v1057
    %v1306 = vpack.c.b16 %v1062, %v1058
    %v1307 = vpack.c.b16 %v1067, %v1063
    %v1308 = vpack.c.b16 %v1068, %v1064
    %v1309 = vpack.c.b16 %v1069, %v1065
    %v1310 = vpack.c.b16 %v1070, %v1066
    %v1311 = vpack.c.b16 %v1075, %v1071
    %v1312 = vpack.c.b16 %v1076, %v1072
    %v1313 = vpack.c.b16 %v1077, %v1073
    %v1314 = vpack.c.b16 %v1078, %v1074
    %v1315 = vpack.c.b16 %v1083, %v1079
    %v1316 = vpack.c.b16 %v1084, %v1080
    %v1317 = vpack.c.b16 %v1085, %v1081
    %v1318 = vpack.c.b16 %v1086, %v1082
    %v1319 = vpack.c.b16 %v1091, %v1087
    %v1320 = vpack.c.b16 %v1092, %v1088
    %v1321 = vpack.c.b16 %v1093, %v1089
    %v1322 = vpack.c.b16 %v1094, %v1090
    %v1323 = vpack.c.b16 %v1099, %v1095
    %v1324 = vpack.c.b16 %v1100, %v1096
    %v1325 = vpack.c.b16 %v1101, %v1097
    %v1326 = vpack.c.b16 %v1102, %v1098
    %v1327 = vpack.c.b16 %v1107, %v1103
    %v1328 = vpack.c.b16 %v1108, %v1104
    %v1329 = vpack.c.b16 %v1109, %v1105
    %v1330 = vpack.c.b16 %v1110, %v1106
    %v1331 = vpack.c.b16 %v1115, %v1111
    %v1332 = vpack.c.b16 %v1116, %v1112
    %v1333 = vpack.c.b16 %v1117, %v1113
    %v1334 = vpack.c.b16 %v1118, %v1114
    %v1335 = vpack.c.b16 %v1123, %v1119
    %v1336 = vpack.c.b16 %v1124, %v1120
    %v1337 = vpack.c.b16 %v1125, %v1121
    %v1338 = vpack.c.b16 %v1126, %v1122
    %v1339 = vpack.c.b16 %v1131, %v1127
    %v1340 = vpack.c.b16 %v1132, %v1128
    %v1341 = vpack.c.b16 %v1133, %v1129
    %v1342 = vpack.c.b16 %v1134, %v1130
    %v1343 = vpack.c.b16 %v1139, %v1135
    %v1344 = vpack.c.b16 %v1140, %v1136
    %v1345 = vpack.c.b16 %v1141, %v1137
    %v1346 = vpack.c.b16 %v1142, %v1138
    %v1347 = vpack.c.b16 %v1147, %v1143
    %v1348 = vpack.c.b16 %v1148, %v1144
    %v1349 = vpack.c.b16 %v1149, %v1145
    %v1350 = vpack.c.b16 %v1150, %v1146
    %v1351 = vpack.c.b16 %v1155, %v1151
    %v1352 = vpack.c.b16 %v1156, %v1152
    %v1353 = vpack.c.b16 %v1157, %v1153
    %v1354 = vpack.c.b16 %v1158, %v1154
    %v1355 = vpack.c.b16 %v1163, %v1159
    %v1356 = vpack.c.b16 %v1164, %v1160
    %v1357 = vpack.c.b16 %v1165, %v1161
    %v1358 = vpack.c.b16 %v1166, %v1162
    %v1359 = vpack.c.b16 %v1171, %v1167
    %v1360 = vpack.c.b16 %v1172, %v1168
    %v1361 = vpack.c.b16 %v1173, %v1169
    %v1362 = vpack.c.b16 %v1174, %v1170
    %v1363 = vpack.c.b16 %v1179, %v1175
    %v1364 = vpack.c.b16 %v1180, %v1176
    %v1365 = vpack.c.b16 %v1181, %v1177
    %v1366 = vpack.c.b16 %v1182, %v1178
    %v1367 = vpack.c.b16 %v1187, %v1183
    %v1368 = vpack.c.b16 %v1188, %v1184
    %v1369 = vpack.c.b16 %v1189, %v1185
    %v1370 = vpack.c.b16 %v1190, %v1186
    %v1371 = vpack.c.b16 %v1195, %v1191
    %v1372 = vpack.c.b16 %v1196, %v1192
    %v1373 = vpack.c.b16 %v1197, %v1193
    %v1374 = vpack.c.b16 %v1198, %v1194
    %v1375 = vpack.c.b16 %v1203, %v1199
    %v1376 = vpack.c.b16 %v1204, %v1200
    %v1377 = vpack.c.b16 %v1205, %v1201
    %v1378 = vpack.c.b16 %v1206, %v1202
    %v1379 = vpack.c.b16 %v1211, %v1207
    %v1380 = vpack.c.b16 %v1212, %v1208
    %v1381 = vpack.c.b16 %v1213, %v1209
    %v1382 = vpack.c.b16 %v1214, %v1210
    %v1383 = vpack.c.b16 %v1219, %v1215
    %v1384 = vpack.c.b16 %v1220, %v1216
    %v1385 = vpack.c.b16 %v1221, %v1217
    %v1386 = vpack.c.b16 %v1222, %v1218
    %v1387 = vpack.c.b16 %v1227, %v1223
    %v1388 = vpack.c.b16 %v1228, %v1224
    %v1389 = vpack.c.b16 %v1229, %v1225
    %v1390 = vpack.c.b16 %v1230, %v1226
    %v1391 = vpack.c.b16 %v1235, %v1231
    %v1392 = vpack.c.b16 %v1236, %v1232
    %v1393 = vpack.c.b16 %v1237, %v1233
    %v1394 = vpack.c.b16 %v1238, %v1234
    %v1395 = vpack.c.b16 %v1243, %v1239
    %v1396 = vpack.c.b16 %v1244, %v1240
    %v1397 = vpack.c.b16 %v1245, %v1241
    %v1398 = vpack.c.b16 %v1246, %v1242
    %v1399 = vpack.c.b16 %v1251, %v1247
    %v1400 = vpack.c.b16 %v1252, %v1248
    %v1401 = vpack.c.b16 %v1253, %v1249
    %v1402 = vpack.c.b16 %v1254, %v1250
    %v1403 = vpack.c.b16 %v1259, %v1255
    %v1404 = vpack.c.b16 %v1260, %v1256
    %v1405 = vpack.c.b16 %v1261, %v1257
    %v1406 = vpack.c.b16 %v1262, %v1258
    %v1407 = vpack.c.b16 %v1267, %v1263
    %v1408 = vpack.c.b16 %v1268, %v1264
    %v1409 = vpack.c.b16 %v1269, %v1265
    %v1410 = vpack.c.b16 %v1270, %v1266
    %v1411 = vpack.c.b16 %v1275, %v1271
    %v1412 = vpack.c.b16 %v1276, %v1272
    %v1413 = vpack.c.b16 %v1277, %v1273
    %v1414 = vpack.c.b16 %v1278, %v1274
    %v1415 = vpack.c.b16 %v1283, %v1279
    %v1416 = vpack.c.b16 %v1284, %v1280
    %v1417 = vpack.c.b16 %v1285, %v1281
    %v1418 = vpack.c.b16 %v1286, %v1282
    %v1419 = vpack.c.b16 %v1291, %v1287
    %v1420 = vpack.c.b16 %v1292, %v1288
    %v1421 = vpack.c.b16 %v1293, %v1289
    %v1422 = vpack.c.b16 %v1294, %v1290
    %1551 = vmatprep.subr.bf16.mxu0 %v1324
    %1552 = vmatpush1.bf16.msra.mxu0 %v1323
    %1553 = vmatprep.subr.bf16.mxu0 %v1320
    %1554 = vmatpush1.bf16.msra.mxu0 %v1319
    %1555 = vmatprep.subr.bf16.mxu0 %v1316
    %1556 = vmatpush1.bf16.msra.mxu0 %v1315
    %1557 = vmatprep.subr.bf16.mxu0 %v1312
    %1558 = vmatpush1.bf16.msra.mxu0 %v1311
    %1559 = vmatprep.subr.bf16.mxu0 %v1308
    %1560 = vmatpush1.bf16.msra.mxu0 %v1307
    %1561 = vmatprep.subr.bf16.mxu0 %v1304
    %1562 = vmatpush1.bf16.msra.mxu0 %v1303
    %1563 = vmatprep.subr.bf16.mxu0 %v1300
    %1564 = vmatpush1.bf16.msra.mxu0 %v1299
    %1565 = vmatprep.subr.bf16.mxu0 %v1296
    %1566 = vmatpush1.bf16.msra.mxu0 %v1295
    %1567 = vmatprep.subr.bf16.mxu0 %v1356
    %1568 = vmatpush2.bf16.msra.mxu0 %v1355
    %1569 = vmatprep.subr.bf16.mxu0 %v1352
    %1570 = vmatpush2.bf16.msra.mxu0 %v1351
    %1571 = vmatprep.subr.bf16.mxu0 %v1348
    %1572 = vmatpush2.bf16.msra.mxu0 %v1347
    %1573 = vmatprep.subr.bf16.mxu0 %v1344
    %1574 = vmatpush2.bf16.msra.mxu0 %v1343
    %1575 = vmatprep.subr.bf16.mxu0 %v1340
    %1576 = vmatpush2.bf16.msra.mxu0 %v1339
    %1577 = vmatprep.subr.bf16.mxu0 %v1336
    %1578 = vmatpush2.bf16.msra.mxu0 %v1335
    %1579 = vmatprep.subr.bf16.mxu0 %v1332
    %1580 = vmatpush2.bf16.msra.mxu0 %v1331
    %1581 = vmatprep.subr.bf16.mxu0 %v1328
    %1582 = vmatpush2.bf16.msra.mxu0 %v1327
    %1583 = vmatprep.mubr.bf16.mxu0 %v758
    %1584 = vmatmul.mubr.bf16.gmra.mxu0 %v757
    %v1585 = vpop.f32.mrf.mxu0
    %v1586 = vadd.f32 %v894, %v1585
    %v1587 = vpop.f32.mrf.mxu0
    %v1588 = vadd.f32 %v898, %v1587
    %v1589 = vpop.f32.mrf.mxu0
    %v1590 = vadd.f32 %v894, %v1589
    %v1591 = vpop.f32.mrf.mxu0
    %v1592 = vadd.f32 %v898, %v1591
    %1593 = vdwg.mxu0
    %1594 = vmatprep.subr.bf16.mxu0 %v1388
    %1595 = vmatpush1.bf16.msra.mxu0 %v1387
    %1596 = vmatprep.subr.bf16.mxu0 %v1384
    %1597 = vmatpush1.bf16.msra.mxu0 %v1383
    %1598 = vmatprep.subr.bf16.mxu0 %v1380
    %1599 = vmatpush1.bf16.msra.mxu0 %v1379
    %1600 = vmatprep.subr.bf16.mxu0 %v1376
    %1601 = vmatpush1.bf16.msra.mxu0 %v1375
    %1602 = vmatprep.subr.bf16.mxu0 %v1372
    %1603 = vmatpush1.bf16.msra.mxu0 %v1371
    %1604 = vmatprep.subr.bf16.mxu0 %v1368
    %1605 = vmatpush1.bf16.msra.mxu0 %v1367
    %1606 = vmatprep.subr.bf16.mxu0 %v1364
    %1607 = vmatpush1.bf16.msra.mxu0 %v1363
    %1608 = vmatprep.subr.bf16.mxu0 %v1360
    %1609 = vmatpush1.bf16.msra.mxu0 %v1359
    %1610 = vmatprep.subr.bf16.mxu0 %v1420
    %1611 = vmatpush2.bf16.msra.mxu0 %v1419
    %1612 = vmatprep.subr.bf16.mxu0 %v1416
    %1613 = vmatpush2.bf16.msra.mxu0 %v1415
    %1614 = vmatprep.subr.bf16.mxu0 %v1412
    %1615 = vmatpush2.bf16.msra.mxu0 %v1411
    %1616 = vmatprep.subr.bf16.mxu0 %v1408
    %1617 = vmatpush2.bf16.msra.mxu0 %v1407
    %1618 = vmatprep.subr.bf16.mxu0 %v1404
    %1619 = vmatpush2.bf16.msra.mxu0 %v1403
    %1620 = vmatprep.subr.bf16.mxu0 %v1400
    %1621 = vmatpush2.bf16.msra.mxu0 %v1399
    %1622 = vmatprep.subr.bf16.mxu0 %v1396
    %1623 = vmatpush2.bf16.msra.mxu0 %v1395
    %1624 = vmatprep.subr.bf16.mxu0 %v1392
    %1625 = vmatpush2.bf16.msra.mxu0 %v1391
    %1626 = vmatprep.mubr.bf16.mxu0 %v760
    %1627 = vmatmul.mubr.bf16.gmra.mxu0 %v759
    %v1628 = vpop.f32.mrf.mxu0
    %v1629 = vadd.f32 %v1586, %v1628
    %v1630 = vpop.f32.mrf.mxu0
    %v1631 = vadd.f32 %v1588, %v1630
    %v1632 = vpop.f32.mrf.mxu0
    %v1633 = vadd.f32 %v1590, %v1632
    %v1634 = vpop.f32.mrf.mxu0
    %v1635 = vadd.f32 %v1592, %v1634
    %1636 = vdwg.mxu0
    %1637 = vmatprep.subr.bf16.mxu0 %v1326
    %1638 = vmatpush1.bf16.msra.mxu0 %v1325
    %1639 = vmatprep.subr.bf16.mxu0 %v1322
    %1640 = vmatpush1.bf16.msra.mxu0 %v1321
    %1641 = vmatprep.subr.bf16.mxu0 %v1318
    %1642 = vmatpush1.bf16.msra.mxu0 %v1317
    %1643 = vmatprep.subr.bf16.mxu0 %v1314
    %1644 = vmatpush1.bf16.msra.mxu0 %v1313
    %1645 = vmatprep.subr.bf16.mxu0 %v1310
    %1646 = vmatpush1.bf16.msra.mxu0 %v1309
    %1647 = vmatprep.subr.bf16.mxu0 %v1306
    %1648 = vmatpush1.bf16.msra.mxu0 %v1305
    %1649 = vmatprep.subr.bf16.mxu0 %v1302
    %1650 = vmatpush1.bf16.msra.mxu0 %v1301
    %1651 = vmatprep.subr.bf16.mxu0 %v1298
    %1652 = vmatpush1.bf16.msra.mxu0 %v1297
    %1653 = vmatprep.subr.bf16.mxu0 %v1358
    %1654 = vmatpush2.bf16.msra.mxu0 %v1357
    %1655 = vmatprep.subr.bf16.mxu0 %v1354
    %1656 = vmatpush2.bf16.msra.mxu0 %v1353
    %1657 = vmatprep.subr.bf16.mxu0 %v1350
    %1658 = vmatpush2.bf16.msra.mxu0 %v1349
    %1659 = vmatprep.subr.bf16.mxu0 %v1346
    %1660 = vmatpush2.bf16.msra.mxu0 %v1345
    %1661 = vmatprep.subr.bf16.mxu0 %v1342
    %1662 = vmatpush2.bf16.msra.mxu0 %v1341
    %1663 = vmatprep.subr.bf16.mxu0 %v1338
    %1664 = vmatpush2.bf16.msra.mxu0 %v1337
    %1665 = vmatprep.subr.bf16.mxu0 %v1334
    %1666 = vmatpush2.bf16.msra.mxu0 %v1333
    %1667 = vmatprep.subr.bf16.mxu0 %v1330
    %1668 = vmatpush2.bf16.msra.mxu0 %v1329
    %1669 = vmatprep.mubr.bf16.mxu0 %v758
    %1670 = vmatmul.mubr.bf16.gmra.mxu0 %v757
    %v1671 = vpop.f32.mrf.mxu0
    %v1672 = vadd.f32 %v902, %v1671
    %v1673 = vpop.f32.mrf.mxu0
    %v1674 = vadd.f32 %v906, %v1673
    %v1675 = vpop.f32.mrf.mxu0
    %v1676 = vadd.f32 %v902, %v1675
    %v1677 = vpop.f32.mrf.mxu0
    %v1678 = vadd.f32 %v906, %v1677
    %1679 = vdwg.mxu0
    %1680 = vmatprep.subr.bf16.mxu0 %v1390
    %1681 = vmatpush1.bf16.msra.mxu0 %v1389
    %1682 = vmatprep.subr.bf16.mxu0 %v1386
    %1683 = vmatpush1.bf16.msra.mxu0 %v1385
    %1684 = vmatprep.subr.bf16.mxu0 %v1382
    %1685 = vmatpush1.bf16.msra.mxu0 %v1381
    %1686 = vmatprep.subr.bf16.mxu0 %v1378
    %1687 = vmatpush1.bf16.msra.mxu0 %v1377
    %1688 = vmatprep.subr.bf16.mxu0 %v1374
    %1689 = vmatpush1.bf16.msra.mxu0 %v1373
    %1690 = vmatprep.subr.bf16.mxu0 %v1370
    %1691 = vmatpush1.bf16.msra.mxu0 %v1369
    %1692 = vmatprep.subr.bf16.mxu0 %v1366
    %1693 = vmatpush1.bf16.msra.mxu0 %v1365
    %1694 = vmatprep.subr.bf16.mxu0 %v1362
    %1695 = vmatpush1.bf16.msra.mxu0 %v1361
    %1696 = vmatprep.subr.bf16.mxu0 %v1422
    %1697 = vmatpush2.bf16.msra.mxu0 %v1421
    %1698 = vmatprep.subr.bf16.mxu0 %v1418
    %1699 = vmatpush2.bf16.msra.mxu0 %v1417
    %1700 = vmatprep.subr.bf16.mxu0 %v1414
    %1701 = vmatpush2.bf16.msra.mxu0 %v1413
    %1702 = vmatprep.subr.bf16.mxu0 %v1410
    %1703 = vmatpush2.bf16.msra.mxu0 %v1409
    %1704 = vmatprep.subr.bf16.mxu0 %v1406
    %1705 = vmatpush2.bf16.msra.mxu0 %v1405
    %1706 = vmatprep.subr.bf16.mxu0 %v1402
    %1707 = vmatpush2.bf16.msra.mxu0 %v1401
    %1708 = vmatprep.subr.bf16.mxu0 %v1398
    %1709 = vmatpush2.bf16.msra.mxu0 %v1397
    %1710 = vmatprep.subr.bf16.mxu0 %v1394
    %1711 = vmatpush2.bf16.msra.mxu0 %v1393
    %1712 = vmatprep.mubr.bf16.mxu0 %v760
    %1713 = vmatmul.mubr.bf16.gmra.mxu0 %v759
    %v1714 = vpop.f32.mrf.mxu0
    %v1715 = vadd.f32 %v1672, %v1714
    %v1716 = vpop.f32.mrf.mxu0
    %v1717 = vadd.f32 %v1674, %v1716
    %v1718 = vpop.f32.mrf.mxu0
    %v1719 = vadd.f32 %v1676, %v1718
    %v1720 = vpop.f32.mrf.mxu0
    %v1721 = vadd.f32 %v1678, %v1720
    %1722 = vdwg.mxu0
    %v1723 = vmax.f32 %v1629, 0.0
    %v1724 = vmax.f32 %v1631, 0.0
    %v1725 = vmax.f32 %v1715, 0.0
    %v1726 = vmax.f32 %v1717, 0.0
    %v1727 = vmax.f32 %v1633, 0.0
    %v1728 = vmax.f32 %v1635, 0.0
    %v1729 = vmax.f32 %v1719, 0.0
    %v1730 = vmax.f32 %v1721, 0.0
    %v1731 = vpack.c.bf16 %v1727, %v1723
    %v1732 = vpack.c.bf16 %v1728, %v1724
    %v1733 = vpack.c.bf16 %v1729, %v1725
    %v1734 = vpack.c.bf16 %v1730, %v1726
    %v1735 = vld [vmem:[%s5] sm:$0xf]
    %v1736 = vld [vmem:[%s5 + $0x4] sm:$0xf]
    %v1737 = vld [vmem:[%s5 + $0x8] sm:$0xf]
    %v1738 = vld [vmem:[%s5 + $0xc] sm:$0xf]
    %v1739 = vld [vmem:[%s5 + $0x10] sm:$0xf]
    %v1740 = vld [vmem:[%s5 + $0x14] sm:$0xf]
    %v1741 = vld [vmem:[%s5 + $0x18] sm:$0xf]
    %v1742 = vld [vmem:[%s5 + $0x1c] sm:$0xf]
    %v1743 = vld [vmem:[%s5 + $0x20] sm:$0xf]
    %v1744 = vld [vmem:[%s5 + $0x24] sm:$0xf]
    %v1745 = vld [vmem:[%s5 + $0x28] sm:$0xf]
    %v1746 = vld [vmem:[%s5 + $0x2c] sm:$0xf]
    %v1747 = vld [vmem:[%s5 + $0x30] sm:$0xf]
    %v1748 = vld [vmem:[%s5 + $0x34] sm:$0xf]
    %v1749 = vld [vmem:[%s5 + $0x38] sm:$0xf]
    %v1750 = vld [vmem:[%s5 + $0x3c] sm:$0xf]
    %v1751 = vld [vmem:[%s5 + $0x40] sm:$0xf]
    %v1752 = vld [vmem:[%s5 + $0x44] sm:$0xf]
    %v1753 = vld [vmem:[%s5 + $0x48] sm:$0xf]
    %v1754 = vld [vmem:[%s5 + $0x4c] sm:$0xf]
    %v1755 = vld [vmem:[%s5 + $0x50] sm:$0xf]
    %v1756 = vld [vmem:[%s5 + $0x54] sm:$0xf]
    %v1757 = vld [vmem:[%s5 + $0x58] sm:$0xf]
    %v1758 = vld [vmem:[%s5 + $0x5c] sm:$0xf]
    %v1759 = vld [vmem:[%s5 + $0x60] sm:$0xf]
    %v1760 = vld [vmem:[%s5 + $0x64] sm:$0xf]
    %v1761 = vld [vmem:[%s5 + $0x68] sm:$0xf]
    %v1762 = vld [vmem:[%s5 + $0x6c] sm:$0xf]
    %v1763 = vld [vmem:[%s5 + $0x70] sm:$0xf]
    %v1764 = vld [vmem:[%s5 + $0x74] sm:$0xf]
    %v1765 = vld [vmem:[%s5 + $0x78] sm:$0xf]
    %v1766 = vld [vmem:[%s5 + $0x7c] sm:$0xf]
    %v1767 = vld [vmem:[%s5 + $0x80] sm:$0xf]
    %v1768 = vld [vmem:[%s5 + $0x84] sm:$0xf]
    %v1769 = vld [vmem:[%s5 + $0x88] sm:$0xf]
    %v1770 = vld [vmem:[%s5 + $0x8c] sm:$0xf]
    %v1771 = vld [vmem:[%s5 + $0x90] sm:$0xf]
    %v1772 = vld [vmem:[%s5 + $0x94] sm:$0xf]
    %v1773 = vld [vmem:[%s5 + $0x98] sm:$0xf]
    %v1774 = vld [vmem:[%s5 + $0x9c] sm:$0xf]
    %v1775 = vld [vmem:[%s5 + $0xa0] sm:$0xf]
    %v1776 = vld [vmem:[%s5 + $0xa4] sm:$0xf]
    %v1777 = vld [vmem:[%s5 + $0xa8] sm:$0xf]
    %v1778 = vld [vmem:[%s5 + $0xac] sm:$0xf]
    %v1779 = vld [vmem:[%s5 + $0xb0] sm:$0xf]
    %v1780 = vld [vmem:[%s5 + $0xb4] sm:$0xf]
    %v1781 = vld [vmem:[%s5 + $0xb8] sm:$0xf]
    %v1782 = vld [vmem:[%s5 + $0xbc] sm:$0xf]
    %v1783 = vld [vmem:[%s5 + $0xc0] sm:$0xf]
    %v1784 = vld [vmem:[%s5 + $0xc4] sm:$0xf]
    %v1785 = vld [vmem:[%s5 + $0xc8] sm:$0xf]
    %v1786 = vld [vmem:[%s5 + $0xcc] sm:$0xf]
    %v1787 = vld [vmem:[%s5 + $0xd0] sm:$0xf]
    %v1788 = vld [vmem:[%s5 + $0xd4] sm:$0xf]
    %v1789 = vld [vmem:[%s5 + $0xd8] sm:$0xf]
    %v1790 = vld [vmem:[%s5 + $0xdc] sm:$0xf]
    %v1791 = vld [vmem:[%s5 + $0xe0] sm:$0xf]
    %v1792 = vld [vmem:[%s5 + $0xe4] sm:$0xf]
    %v1793 = vld [vmem:[%s5 + $0xe8] sm:$0xf]
    %v1794 = vld [vmem:[%s5 + $0xec] sm:$0xf]
    %v1795 = vld [vmem:[%s5 + $0xf0] sm:$0xf]
    %v1796 = vld [vmem:[%s5 + $0xf4] sm:$0xf]
    %v1797 = vld [vmem:[%s5 + $0xf8] sm:$0xf]
    %v1798 = vld [vmem:[%s5 + $0xfc] sm:$0xf]
    %v1799 = vld [vmem:[%s6] sm:$0x1]
    %v1801 = vlaneseq
    %v1802 = vshrl.u32 %v1801, 7
    %v1803 = vsub.s32 0, %v1802
    %v1804 = vrot.slane %v1799, %v1803
    %v1870 = vunpack.c.l.b16 %v1735
    %v1871 = vunpack.c.l.b16 %v1736
    %v1872 = vunpack.c.l.b16 %v1737
    %v1873 = vunpack.c.l.b16 %v1738
    %v1874 = vunpack.c.l.b16 %v1739
    %v1875 = vunpack.c.l.b16 %v1740
    %v1876 = vunpack.c.l.b16 %v1741
    %v1877 = vunpack.c.l.b16 %v1742
    %v1878 = vunpack.c.l.b16 %v1743
    %v1879 = vunpack.c.l.b16 %v1744
    %v1880 = vunpack.c.l.b16 %v1745
    %v1881 = vunpack.c.l.b16 %v1746
    %v1882 = vunpack.c.l.b16 %v1747
    %v1883 = vunpack.c.l.b16 %v1748
    %v1884 = vunpack.c.l.b16 %v1749
    %v1885 = vunpack.c.l.b16 %v1750
    %v1886 = vunpack.c.l.b16 %v1751
    %v1887 = vunpack.c.l.b16 %v1752
    %v1888 = vunpack.c.l.b16 %v1753
    %v1889 = vunpack.c.l.b16 %v1754
    %v1890 = vunpack.c.l.b16 %v1755
    %v1891 = vunpack.c.l.b16 %v1756
    %v1892 = vunpack.c.l.b16 %v1757
    %v1893 = vunpack.c.l.b16 %v1758
    %v1894 = vunpack.c.l.b16 %v1759
    %v1895 = vunpack.c.l.b16 %v1760
    %v1896 = vunpack.c.l.b16 %v1761
    %v1897 = vunpack.c.l.b16 %v1762
    %v1898 = vunpack.c.l.b16 %v1763
    %v1899 = vunpack.c.l.b16 %v1764
    %v1900 = vunpack.c.l.b16 %v1765
    %v1901 = vunpack.c.l.b16 %v1766
    %v1902 = vunpack.c.l.b16 %v1767
    %v1903 = vunpack.c.l.b16 %v1768
    %v1904 = vunpack.c.l.b16 %v1769
    %v1905 = vunpack.c.l.b16 %v1770
    %v1906 = vunpack.c.l.b16 %v1771
    %v1907 = vunpack.c.l.b16 %v1772
    %v1908 = vunpack.c.l.b16 %v1773
    %v1909 = vunpack.c.l.b16 %v1774
    %v1910 = vunpack.c.l.b16 %v1775
    %v1911 = vunpack.c.l.b16 %v1776
    %v1912 = vunpack.c.l.b16 %v1777
    %v1913 = vunpack.c.l.b16 %v1778
    %v1914 = vunpack.c.l.b16 %v1779
    %v1915 = vunpack.c.l.b16 %v1780
    %v1916 = vunpack.c.l.b16 %v1781
    %v1917 = vunpack.c.l.b16 %v1782
    %v1918 = vunpack.c.l.b16 %v1783
    %v1919 = vunpack.c.l.b16 %v1784
    %v1920 = vunpack.c.l.b16 %v1785
    %v1921 = vunpack.c.l.b16 %v1786
    %v1922 = vunpack.c.l.b16 %v1787
    %v1923 = vunpack.c.l.b16 %v1788
    %v1924 = vunpack.c.l.b16 %v1789
    %v1925 = vunpack.c.l.b16 %v1790
    %v1926 = vunpack.c.l.b16 %v1791
    %v1927 = vunpack.c.l.b16 %v1792
    %v1928 = vunpack.c.l.b16 %v1793
    %v1929 = vunpack.c.l.b16 %v1794
    %v1930 = vunpack.c.l.b16 %v1795
    %v1931 = vunpack.c.l.b16 %v1796
    %v1932 = vunpack.c.l.b16 %v1797
    %v1933 = vunpack.c.l.b16 %v1798
    %v1934 = vpack.c.b16 %v1871, %v1870
    %v1935 = vpack.c.b16 %v1873, %v1872
    %v1936 = vpack.c.b16 %v1875, %v1874
    %v1937 = vpack.c.b16 %v1877, %v1876
    %v1938 = vpack.c.b16 %v1879, %v1878
    %v1939 = vpack.c.b16 %v1881, %v1880
    %v1940 = vpack.c.b16 %v1883, %v1882
    %v1941 = vpack.c.b16 %v1885, %v1884
    %v1942 = vpack.c.b16 %v1887, %v1886
    %v1943 = vpack.c.b16 %v1889, %v1888
    %v1944 = vpack.c.b16 %v1891, %v1890
    %v1945 = vpack.c.b16 %v1893, %v1892
    %v1946 = vpack.c.b16 %v1895, %v1894
    %v1947 = vpack.c.b16 %v1897, %v1896
    %v1948 = vpack.c.b16 %v1899, %v1898
    %v1949 = vpack.c.b16 %v1901, %v1900
    %v1950 = vpack.c.b16 %v1903, %v1902
    %v1951 = vpack.c.b16 %v1905, %v1904
    %v1952 = vpack.c.b16 %v1907, %v1906
    %v1953 = vpack.c.b16 %v1909, %v1908
    %v1954 = vpack.c.b16 %v1911, %v1910
    %v1955 = vpack.c.b16 %v1913, %v1912
    %v1956 = vpack.c.b16 %v1915, %v1914
    %v1957 = vpack.c.b16 %v1917, %v1916
    %v1958 = vpack.c.b16 %v1919, %v1918
    %v1959 = vpack.c.b16 %v1921, %v1920
    %v1960 = vpack.c.b16 %v1923, %v1922
    %v1961 = vpack.c.b16 %v1925, %v1924
    %v1962 = vpack.c.b16 %v1927, %v1926
    %v1963 = vpack.c.b16 %v1929, %v1928
    %v1964 = vpack.c.b16 %v1931, %v1930
    %v1965 = vpack.c.b16 %v1933, %v1932
    %1998 = vmatprep.subr.bf16.mxu0 0
    %1999 = vmatpush1.bf16.msra.mxu0 %v1941
    %2000 = vmatprep.subr.bf16.mxu0 0
    %2001 = vmatpush1.bf16.msra.mxu0 %v1940
    %2002 = vmatprep.subr.bf16.mxu0 0
    %2003 = vmatpush1.bf16.msra.mxu0 %v1939
    %2004 = vmatprep.subr.bf16.mxu0 0
    %2005 = vmatpush1.bf16.msra.mxu0 %v1938
    %2006 = vmatprep.subr.bf16.mxu0 0
    %2007 = vmatpush1.bf16.msra.mxu0 %v1937
    %2008 = vmatprep.subr.bf16.mxu0 0
    %2009 = vmatpush1.bf16.msra.mxu0 %v1936
    %2010 = vmatprep.subr.bf16.mxu0 0
    %2011 = vmatpush1.bf16.msra.mxu0 %v1935
    %2012 = vmatprep.subr.bf16.mxu0 0
    %2013 = vmatpush1.bf16.msra.mxu0 %v1934
    %2014 = vmatprep.subr.bf16.mxu0 0
    %2015 = vmatpush2.bf16.msra.mxu0 %v1949
    %2016 = vmatprep.subr.bf16.mxu0 0
    %2017 = vmatpush2.bf16.msra.mxu0 %v1948
    %2018 = vmatprep.subr.bf16.mxu0 0
    %2019 = vmatpush2.bf16.msra.mxu0 %v1947
    %2020 = vmatprep.subr.bf16.mxu0 0
    %2021 = vmatpush2.bf16.msra.mxu0 %v1946
    %2022 = vmatprep.subr.bf16.mxu0 0
    %2023 = vmatpush2.bf16.msra.mxu0 %v1945
    %2024 = vmatprep.subr.bf16.mxu0 0
    %2025 = vmatpush2.bf16.msra.mxu0 %v1944
    %2026 = vmatprep.subr.bf16.mxu0 0
    %2027 = vmatpush2.bf16.msra.mxu0 %v1943
    %2028 = vmatprep.subr.bf16.mxu0 0
    %2029 = vmatpush2.bf16.msra.mxu0 %v1942
    %2030 = vmatprep.mubr.bf16.mxu0 %v1732
    %2031 = vmatmul.mubr.bf16.gmra.mxu0 %v1731
    %v2032 = vpop.f32.mrf.mxu0
    %v2033 = vadd.f32 %v1804, %v2032
    %v2034 = vpop.f32.mrf.mxu0
    %v2035 = vpop.f32.mrf.mxu0
    %v2036 = vadd.f32 %v1804, %v2035
    %v2037 = vpop.f32.mrf.mxu0
    %2038 = vdwg.mxu0
    %2039 = vmatprep.subr.bf16.mxu0 0
    %2040 = vmatpush1.bf16.msra.mxu0 %v1957
    %2041 = vmatprep.subr.bf16.mxu0 0
    %2042 = vmatpush1.bf16.msra.mxu0 %v1956
    %2043 = vmatprep.subr.bf16.mxu0 0
    %2044 = vmatpush1.bf16.msra.mxu0 %v1955
    %2045 = vmatprep.subr.bf16.mxu0 0
    %2046 = vmatpush1.bf16.msra.mxu0 %v1954
    %2047 = vmatprep.subr.bf16.mxu0 0
    %2048 = vmatpush1.bf16.msra.mxu0 %v1953
    %2049 = vmatprep.subr.bf16.mxu0 0
    %2050 = vmatpush1.bf16.msra.mxu0 %v1952
    %2051 = vmatprep.subr.bf16.mxu0 0
    %2052 = vmatpush1.bf16.msra.mxu0 %v1951
    %2053 = vmatprep.subr.bf16.mxu0 0
    %2054 = vmatpush1.bf16.msra.mxu0 %v1950
    %2055 = vmatprep.subr.bf16.mxu0 0
    %2056 = vmatpush2.bf16.msra.mxu0 %v1965
    %2057 = vmatprep.subr.bf16.mxu0 0
    %2058 = vmatpush2.bf16.msra.mxu0 %v1964
    %2059 = vmatprep.subr.bf16.mxu0 0
    %2060 = vmatpush2.bf16.msra.mxu0 %v1963
    %2061 = vmatprep.subr.bf16.mxu0 0
    %2062 = vmatpush2.bf16.msra.mxu0 %v1962
    %2063 = vmatprep.subr.bf16.mxu0 0
    %2064 = vmatpush2.bf16.msra.mxu0 %v1961
    %2065 = vmatprep.subr.bf16.mxu0 0
    %2066 = vmatpush2.bf16.msra.mxu0 %v1960
    %2067 = vmatprep.subr.bf16.mxu0 0
    %2068 = vmatpush2.bf16.msra.mxu0 %v1959
    %2069 = vmatprep.subr.bf16.mxu0 0
    %2070 = vmatpush2.bf16.msra.mxu0 %v1958
    %2071 = vmatprep.mubr.bf16.mxu0 %v1734
    %2072 = vmatmul.mubr.bf16.gmra.mxu0 %v1733
    %v2073 = vpop.f32.mrf.mxu0
    %v2074 = vadd.f32 %v2033, %v2073
    %v2075 = vpop.f32.mrf.mxu0
    %v2076 = vpop.f32.mrf.mxu0
    %v2077 = vadd.f32 %v2036, %v2076
    %v2078 = vpop.f32.mrf.mxu0
    %2079 = vdwg.mxu0
    %v2080 = vpack.c.bf16 %v2077, %v2074
    %v2082 = vcombine.high %v2080, %v2080
    %v2084 = vunpack.c.l.s4 1983009808
    %v2085 = vunpack.c.0.s8 %v2084
    %v2086 = vlaneseq
    %v2087 = vshrl.u32 %v2086, 7
    %v2088 = vsub.s32 %v2085, %v2087
    %v2089 = vrot.slane %v2080, %v2088
    %v2091 = vunpack.c.l.s4 1983009808
    %v2092 = vunpack.c.0.s8 %v2091
    %v2093 = vlaneseq
    %v2094 = vshrl.u32 %v2093, 7
    %v2095 = vsub.s32 %v2092, %v2094
    %v2096 = vrot.slane %v2082, %v2095
    %v2097 = vcombine.high %v2089, %v2089
    %v2098 = vcombine.high %v2096, %v2096
    %2103 = vst [vmem:[#allocation6] sm:$0x3] %v2089
    %2104 = vst [vmem:[#allocation6 + $0x2] sm:$0x3] %v2097
    %2105 = vst [vmem:[#allocation6 + $0x4] sm:$0x3] %v2096
    %2106 = vst [vmem:[#allocation6 + $0x6] sm:$0x3] %v2098
    // Predicated region
    $region38: #{neural_network_forward.1} parent=1 // pred_check
      _
    $region39: #{neural_network_forward.1} parent=1 // pred_check_branch
      %2108 = sbr.rel (0) target = $region41
    $region40: #{neural_network_forward.1} parent=1 // pred_region
      // Predicated region
      $region42: #{neural_network_forward.1} parent=40 // pred_check
        _
      $region43: #{neural_network_forward.1} parent=40 // pred_check_branch
        %2110 = sbr.rel (0) target = $region45
      $region44: #{neural_network_forward.1} parent=40 // pred_region
        // Predicated region
        $region46: #{neural_network_forward.1} parent=44 // pred_check
          _
        $region47: #{neural_network_forward.1} parent=44 // pred_check_branch
          %2112 = sbr.rel target = $region49
        $region48: #{neural_network_forward.1} parent=44 // pred_region
          // Predicated region
          $region61: #{neural_network_forward.1} parent=48 // pred_check
            _
          $region62: #{neural_network_forward.1} parent=48 // pred_check_branch
            %2128 = sbr.rel (0) target = $region64
          $region63: #{neural_network_forward.1} parent=48 // pred_region
            %s2130 = ssub.s32 4, 1
            loop: start=0, step=1, limit=1
            $region65: #{neural_network_forward.1} parent=63 // loop_pre_header
              _
            $region66: #{neural_network_forward.1} parent=63 // loop_header
              %s2132 = sphi 0, %s2136
              %p2133 = scmp.ge.s32.totalorder %s2132, 1
              %s2137 = sphi [#allocation6], [#allocation6]
              %s2138 = sphi %s7, %s7
            $region67: #{neural_network_forward.1} parent=63 // loop_header_branch
              %2135 = sbr.rel (%p2133) target = $region71
            $region68: #{neural_network_forward.1} parent=63 // loop_body
              %v2139 = vld [vmem:[%s2137] sm:%s2130]
              %2140 = vst [vmem:[%s2138] sm:%s2130] %v2139
            $region69: #{neural_network_forward.1} parent=63 // loop_footer
              %s2136 = sadd.s32 1, %s2132
            $region70: #{neural_network_forward.1} parent=63 // loop_footer_branch
              %2131 = sbr.rel target = $region66
            $region71: #{neural_network_forward.1} parent=63 // loop_exit
              _
          $region64: #{neural_network_forward.1} parent=48 // pred_fallthru
            _
        $region49: #{neural_network_forward.1} parent=44 // pred_fallthru
          _
        // Predicated region
        $region50: #{neural_network_forward.1} parent=44 // pred_check
          _
        $region51: #{neural_network_forward.1} parent=44 // pred_check_branch
          %2114 = sbr.rel (0) target = $region53
        $region52: #{neural_network_forward.1} parent=44 // pred_region
          %s2116 = ssub.s32 4, 1
          loop: start=0, step=1, limit=1
          $region54: #{neural_network_forward.1} parent=52 // loop_pre_header
            _
          $region55: #{neural_network_forward.1} parent=52 // loop_header
            %s2118 = sphi 0, %s2122
            %p2119 = scmp.ge.s32.totalorder %s2118, 1
            %s2123 = sphi [#allocation6], [#allocation6]
            %s2124 = sphi %s7, %s7
          $region56: #{neural_network_forward.1} parent=52 // loop_header_branch
            %2121 = sbr.rel (%p2119) target = $region60
          $region57: #{neural_network_forward.1} parent=52 // loop_body
            %v2125 = vld [vmem:[%s2123] sm:%s2116]
            %2126 = vst [vmem:[%s2124] sm:%s2116] %v2125
          $region58: #{neural_network_forward.1} parent=52 // loop_footer
            %s2122 = sadd.s32 1, %s2118
          $region59: #{neural_network_forward.1} parent=52 // loop_footer_branch
            %2117 = sbr.rel target = $region55
          $region60: #{neural_network_forward.1} parent=52 // loop_exit
            _
        $region53: #{neural_network_forward.1} parent=44 // pred_fallthru
          _
      $region45: #{neural_network_forward.1} parent=40 // pred_fallthru
        _
      %2141 = vnop
    $region41: #{neural_network_forward.1} parent=1 // pred_fallthru
      _
    // Predicated region
    $region72: #{neural_network_forward.1} parent=1 // pred_check
      _
    $region73: #{neural_network_forward.1} parent=1 // pred_check_branch
      %2143 = sbr.rel (0) target = $region75
    $region74: #{neural_network_forward.1} parent=1 // pred_region
      _
    $region75: #{neural_network_forward.1} parent=1 // pred_fallthru
      _
    %2144 = vsyncpa [#allocation3], 1
    %2145 = vsyncpa [#allocation5], 1

</llo_original>
